<compile_context>
chip_gen: v6e
topology: v6e:2x2x1
jax: 0.10.0
libtpu: 0.0.40
codegen_flags: <defaults>
</compile_context>

<pallas_src>
import jax
import jax.numpy as jnp
from jax.experimental import pallas as pl
from jax.experimental.pallas import tpu as pltpu


def _fused_head_kernel(x_ref, w_ref, bias_ref, wh_ref, bh_ref, o_ref, acc_ref):
    # x_ref:    (b_tile, tile_hw, Cin) bf16  feature-map row tile (channels-last)
    # w_ref:    (Cin, Cout)            bf16  conv_head weights, BN scale folded
    # bias_ref: (1, Cout)              f32   folded-BN bias
    # wh_ref:   (1, Cout)              f32   head weight row, pre-scaled by 1/HW
    # bh_ref:   (1, 1)                 f32   head bias
    # o_ref:    (b_tile, 1)            f32   output logits ('label') for this batch tile
    # acc_ref:  (b_tile, Cout)         f32   per-batch pooled-sum accumulator (scratch)
    t = pl.program_id(1)

    @pl.when(t == 0)
    def _init():
        acc_ref[...] = jnp.zeros_like(acc_ref)

    b_tile, tile_hw, cin = x_ref.shape
    cout = w_ref.shape[1]

    # conv_head 1x1 conv == channel matmul: flatten the batch tile into M so the
    # MXU sees one (b_tile*tile_hw, Cin) x (Cin, Cout) pass, not b_tile small ones.
    x = x_ref[...].reshape(b_tile * tile_hw, cin)                    # bf16
    y = jnp.dot(x, w_ref[...], preferred_element_type=jnp.float32)   # (rows, Cout) f32

    # folded BN (scale already in w_ref) + SiLU, in f32 (safe on v5e too).
    y = y + bias_ref[...]
    y = y * jax.nn.sigmoid(y)

    # Partial spatial sum for AdaptiveAvgPool2d(1); 1/HW is folded into wh_ref.
    acc_ref[...] += y.reshape(b_tile, tile_hw, cout).sum(axis=1)     # (b_tile, Cout)

    @pl.when(t == pl.num_programs(1) - 1)
    def _finalize():
        pooled = acc_ref[...]                                        # (b_tile, Cout)
        # Linear(Cout, 1): VPU multiply + lane reduction instead of an N=1 matmul.
        o_ref[...] = (jnp.sum(pooled * wh_ref[...], axis=-1, keepdims=True)
                      + bh_ref[...])                                 # (b_tile, 1)


def _pick_b_tile(B):
    """Batch tile: full B when small, else 8-row tiles for lane/sublane legality."""
    if B <= 8:
        return B
    if B % 8 == 0:
        return 8
    return B  # full-dim block is always layout-legal


def _pick_tile_hw(HW, b_tile, max_rows=512):
    """Largest HW tile with b_tile*tile_hw <= max_rows.

    Prefers multiples of 16 (bf16 sublane packing), falls back to multiples of 8,
    else the full HW extent (full-dim block is always legal).
    """
    if b_tile * HW <= max_rows:
        return HW
    cap = max(1, max_rows // b_tile)
    for mult in (16, 8):
        for cand in range(min(HW, cap), 0, -1):
            if HW % cand == 0 and cand % mult == 0:
                return cand
    return HW


def custom_model_forward(feat_nchw, params, tile_hw=None, b_tile=None):
    """feat_nchw: [B, Cin, Hf, Wf] pre-conv_head feature map (NCHW, like torch)."""
    B, C, H, W = feat_nchw.shape
    HW = H * W
    # glue: NCHW -> (B, HW, Cin) channels-last so Cin maps onto the lane axis.
    # Cast to bf16 here: halves the x HBM->VMEM DMA; MXU consumes bf16 anyway.
    x = jnp.transpose(feat_nchw, (0, 2, 3, 1)).reshape(B, HW, C).astype(jnp.bfloat16)

    w_conv = params['w_conv']        # (Cin, Cout)
    scale = params['bn_scale']       # (1, Cout)
    bias = params['bn_bias']         # (1, Cout)
    w_head = params['w_head']        # (Cout, 1)
    b_head = params['b_head']        # (1, 1)
    Cout = w_conv.shape[1]

    # One-time folding in the wrapper:
    #  * BN scale folded into conv weights; weights cast to bf16 (halves the
    #    weight DMA and hits the fast bf16 MXU path).
    #  * 1/HW (the mean) folded into the head weight row -> pooling is a plain sum.
    w_folded = (w_conv * scale).astype(jnp.bfloat16)                 # (Cin, Cout) bf16
    bias_f32 = bias.astype(jnp.float32)                              # (1, Cout)
    wh_row = (jnp.transpose(w_head) / float(HW)).astype(jnp.float32) # (1, Cout)
    bh = b_head.astype(jnp.float32)                                  # (1, 1)

    if b_tile is None:
        b_tile = _pick_b_tile(B)
    if tile_hw is None:
        tile_hw = _pick_tile_hw(HW, b_tile)
    assert B % b_tile == 0, (B, b_tile)
    assert HW % tile_hw == 0, (HW, tile_hw)
    grid = (B // b_tile, HW // tile_hw)

    cost = pl.CostEstimate(
        flops=2 * B * HW * C * Cout + 2 * B * Cout,
        transcendentals=B * HW * Cout,
        bytes_accessed=(x.size * 2 + w_folded.size * 2 + bias_f32.size * 4
                        + wh_row.size * 4 + bh.size * 4 + B * 4),
    )

    label = pl.pallas_call(
        _fused_head_kernel,
        out_shape=jax.ShapeDtypeStruct((B, 1), jnp.float32),
        grid=grid,
        in_specs=[
            # x: tiled over (batch tile, HW tile); double-buffered by the pipeline.
            pl.BlockSpec((b_tile, tile_hw, C), lambda b, t: (b, t, 0)),
            # weights / bias / head: constant index_map -> stay VMEM-resident.
            pl.BlockSpec((C, Cout), lambda b, t: (0, 0)),
            pl.BlockSpec((1, Cout), lambda b, t: (0, 0)),
            pl.BlockSpec((1, Cout), lambda b, t: (0, 0)),
            pl.BlockSpec((1, 1), lambda b, t: (0, 0)),
        ],
        # output: one (b_tile, 1) block per batch tile, written at the last HW tile.
        out_specs=pl.BlockSpec((b_tile, 1), lambda b, t: (b, 0)),
        scratch_shapes=[pltpu.VMEM((b_tile, Cout), jnp.float32)],
        compiler_params=pltpu.CompilerParams(
            dimension_semantics=("parallel", "arbitrary")),
        cost_estimate=cost,
    )(x, w_folded, bias_f32, wh_row, bh)

    return {'label': label}


def _reference_forward(feat_nchw, params):
    """Pure-JAX f32 reference mirroring the PyTorch semantics."""
    B, C, H, W = feat_nchw.shape
    x = jnp.transpose(feat_nchw, (0, 2, 3, 1)).reshape(B, H * W, C)
    y = jnp.einsum('bhc,co->bho', x, params['w_conv'])
    y = y * params['bn_scale'][None] + params['bn_bias'][None]
    y = y * jax.nn.sigmoid(y)
    pooled = jnp.mean(y, axis=1)                                     # pool + squeeze
    return pooled @ params['w_head'] + params['b_head']


if __name__ == "__main__":
    # Small shapes consistent with tf_efficientnetv2_s: for a 128x128 image the
    # last stage emits [B, 256, 4, 4]; conv_head maps 256 -> 1280 features
    # (backbone.out_features == 1280), head maps 1280 -> 1.
    B, Cin, Hf, Wf = 2, 256, 4, 4
    Cout = 1280

    key = jax.random.PRNGKey(0)
    k_feat, k_feat2, k_wc, k_s, k_b, k_wh, k_bh = jax.random.split(key, 7)

    feat = jax.random.normal(k_feat, (B, Cin, Hf, Wf), dtype=jnp.float32)
    params = {
        'w_conv':   jax.random.normal(k_wc, (Cin, Cout), dtype=jnp.float32) * 0.02,
        'bn_scale': 1.0 + 0.1 * jax.random.normal(k_s, (1, Cout), dtype=jnp.float32),
        'bn_bias':  0.1 * jax.random.normal(k_b, (1, Cout), dtype=jnp.float32),
        'w_head':   jax.random.normal(k_wh, (Cout, 1), dtype=jnp.float32) * 0.02,
        'b_head':   0.1 * jax.random.normal(k_bh, (1, 1), dtype=jnp.float32),
    }

    # Default tiling: HW fits in one tile -> a single (B*HW, Cin) MXU matmul.
    ref = _reference_forward(feat, params)
    out = custom_model_forward(feat, params)
    label = jax.block_until_ready(out['label'])
    assert label.shape == (B, 1), label.shape
    assert jnp.allclose(label, ref, rtol=1e-2, atol=1e-2), (label, ref)

    # Larger 8x8 feature map with forced 4-step HW tiling: exercises the
    # pipelined accumulator path (tile_hw=16 -> bf16-friendly sublanes).
    feat2 = jax.random.normal(k_feat2, (B, Cin, 8, 8), dtype=jnp.float32)
    ref2 = _reference_forward(feat2, params)
    out2 = custom_model_forward(feat2, params, tile_hw=16)
    label2 = jax.block_until_ready(out2['label'])
    assert label2.shape == (B, 1), label2.shape
    assert jnp.allclose(label2, ref2, rtol=1e-2, atol=1e-2), (label2, ref2)

    print("KERNEL_OK")
</pallas_src>

<mosaic_0001>
module attributes {stable_mosaic.version = 11 : i64} {
  func.func @_fused_head_kernel(%arg0: i32, %arg1: i32, %arg2: memref<2x16x256xbf16, #tpu.memory_space<vmem>>, %arg3: memref<256x1280xbf16, #tpu.memory_space<vmem>>, %arg4: memref<1x1280xf32, #tpu.memory_space<vmem>>, %arg5: memref<1x1280xf32, #tpu.memory_space<vmem>>, %arg6: memref<1x1xf32, #tpu.memory_space<vmem>>, %arg7: memref<2x1xf32, #tpu.memory_space<vmem>>, %arg8: memref<2x1280xf32, #tpu.memory_space<vmem>>) attributes {dimension_semantics = [#tpu.dimension_semantics<parallel>, #tpu.dimension_semantics<arbitrary>], iteration_bounds = array<i64: 1, 1>, scalar_prefetch = 0 : i64, scratch_operands = 1 : i64, tpu.core_type = #tpu.core_type<tc>, window_params = [{transform_indices = @transform_0, window_bounds = array<i64: 2, 16, 256>}, {pipeline_mode = #tpu.pipeline_mode<synchronous>, transform_indices = @transform_1, window_bounds = array<i64: 256, 1280>}, {pipeline_mode = #tpu.pipeline_mode<synchronous>, transform_indices = @transform_2, window_bounds = array<i64: 1, 1280>}, {pipeline_mode = #tpu.pipeline_mode<synchronous>, transform_indices = @transform_3, window_bounds = array<i64: 1, 1280>}, {pipeline_mode = #tpu.pipeline_mode<synchronous>, transform_indices = @transform_4, window_bounds = array<i64: 1, 1>}, {transform_indices = @transform_5, window_bounds = array<i64: 2, 1>}]} {
    %c0_i32 = arith.constant 0 : i32
    %0 = arith.cmpi eq, %arg1, %c0_i32 : i32
    %1 = arith.extui %0 : i1 to i32
    %c0_i32_0 = arith.constant 0 : i32
    %2 = arith.cmpi ne, %1, %c0_i32_0 : i32
    scf.if %2 {
      %cst_15 = arith.constant 0.000000e+00 : f32
      %24 = vector.broadcast %cst_15 : f32 to vector<2x1280xf32>
      %c0_16 = arith.constant 0 : index
      %c0_17 = arith.constant 0 : index
      %25 = vector.load %arg8[%c0_16, %c0_17] : memref<2x1280xf32, #tpu.memory_space<vmem>>, vector<2x1280xf32>
      tpu.vector_store %arg8[%c0_16, %c0_17], %24 {strides = array<i32>} : memref<2x1280xf32, #tpu.memory_space<vmem>>, vector<2x1280xf32>,
    } else {
    }
    %c0 = arith.constant 0 : index
    %c0_1 = arith.constant 0 : index
    %c0_2 = arith.constant 0 : index
    %3 = vector.load %arg2[%c0, %c0_1, %c0_2] : memref<2x16x256xbf16, #tpu.memory_space<vmem>>, vector<2x16x256xbf16>
    %4 = vector.shape_cast %3 : vector<2x16x256xbf16> to vector<32x256xbf16>
    %c0_3 = arith.constant 0 : index
    %c0_4 = arith.constant 0 : index
    %5 = vector.load %arg3[%c0_3, %c0_4] : memref<256x1280xbf16, #tpu.memory_space<vmem>>, vector<256x1280xbf16>
    %cst = arith.constant dense<0.000000e+00> : vector<32x1280xf32>
    %6 = tpu.matmul %4, %5, %cst {dimension_numbers = #tpu.dot_dimension_numbers<[1], [0], [0], [1], [0, 0, 1, 1], [], []>} : vector<32x256xbf16>, vector<256x1280xbf16>, vector<32x1280xf32> -> vector<32x1280xf32>
    %c0_5 = arith.constant 0 : index
    %c0_6 = arith.constant 0 : index
    %7 = vector.load %arg4[%c0_5, %c0_6] : memref<1x1280xf32, #tpu.memory_space<vmem>>, vector<1x1280xf32>
    %8 = vector.broadcast %7 : vector<1x1280xf32> to vector<32x1280xf32>
    %9 = arith.addf %6, %8 : vector<32x1280xf32>
    %10 = arith.negf %9 : vector<32x1280xf32>
    %11 = math.exp %10 : vector<32x1280xf32>
    %cst_7 = arith.constant 1.000000e+00 : f32
    %12 = vector.broadcast %cst_7 : f32 to vector<32x1280xf32>
    %13 = arith.addf %12, %11 : vector<32x1280xf32>
    %14 = arith.divf %12, %13 : vector<32x1280xf32>
    %15 = arith.mulf %9, %14 : vector<32x1280xf32>
    %c0_8 = arith.constant 0 : index
    %c0_9 = arith.constant 0 : index
    %16 = vector.load %arg8[%c0_8, %c0_9] : memref<2x1280xf32, #tpu.memory_space<vmem>>, vector<2x1280xf32>
    %17 = vector.shape_cast %15 : vector<32x1280xf32> to vector<2x16x1280xf32>
    %cst_10 = arith.constant dense<0.000000e+00> : vector<2x1280xf32>
    %18 = vector.multi_reduction <add>, %17, %cst_10 [1] : vector<2x16x1280xf32> to vector<2x1280xf32>
    %19 = arith.addf %16, %18 : vector<2x1280xf32>
    %c0_11 = arith.constant 0 : index
    %c0_12 = arith.constant 0 : index
    %20 = vector.load %arg8[%c0_11, %c0_12] : memref<2x1280xf32, #tpu.memory_space<vmem>>, vector<2x1280xf32>
    tpu.vector_store %arg8[%c0_11, %c0_12], %19 {strides = array<i32>} : memref<2x1280xf32, #tpu.memory_space<vmem>>, vector<2x1280xf32>,
    %c0_i32_13 = arith.constant 0 : i32
    %21 = arith.cmpi eq, %arg1, %c0_i32_13 : i32
    %22 = arith.extui %21 : i1 to i32
    %c0_i32_14 = arith.constant 0 : i32
    %23 = arith.cmpi ne, %22, %c0_i32_14 : i32
    scf.if %23 {
      %c0_15 = arith.constant 0 : index
      %c0_16 = arith.constant 0 : index
      %24 = vector.load %arg8[%c0_15, %c0_16] : memref<2x1280xf32, #tpu.memory_space<vmem>>, vector<2x1280xf32>
      %c0_17 = arith.constant 0 : index
      %c0_18 = arith.constant 0 : index
      %25 = vector.load %arg5[%c0_17, %c0_18] : memref<1x1280xf32, #tpu.memory_space<vmem>>, vector<1x1280xf32>
      %26 = vector.broadcast %25 : vector<1x1280xf32> to vector<2x1280xf32>
      %27 = arith.mulf %24, %26 : vector<2x1280xf32>
      %cst_19 = arith.constant dense<0.000000e+00> : vector<2xf32>
      %28 = vector.multi_reduction <add>, %27, %cst_19 [1] : vector<2x1280xf32> to vector<2xf32>
      %29 = vector.shape_cast %28 : vector<2xf32> to vector<2x1xf32>
      %c0_20 = arith.constant 0 : index
      %c0_21 = arith.constant 0 : index
      %30 = vector.load %arg6[%c0_20, %c0_21] : memref<1x1xf32, #tpu.memory_space<vmem>>, vector<1x1xf32>
      %31 = vector.broadcast %30 : vector<1x1xf32> to vector<2x1xf32>
      %32 = arith.addf %29, %31 : vector<2x1xf32>
      %c0_22 = arith.constant 0 : index
      %c0_23 = arith.constant 0 : index
      %33 = vector.load %arg7[%c0_22, %c0_23] : memref<2x1xf32, #tpu.memory_space<vmem>>, vector<2x1xf32>
      tpu.vector_store %arg7[%c0_22, %c0_23], %32 {strides = array<i32>} : memref<2x1xf32, #tpu.memory_space<vmem>>, vector<2x1xf32>,
    } else {
    }
    return
  }
  func.func @transform_0(%arg0: i32, %arg1: i32) -> (i32, i32, i32) {
    %c0_i32 = arith.constant 0 : i32
    %c0_i32_0 = arith.constant 0 : i32
    return %arg0, %arg1, %c0_i32 : i32, i32, i32
  }
  func.func @transform_1(%arg0: i32, %arg1: i32) -> (i32, i32) {
    %c0_i32 = arith.constant 0 : i32
    %c0_i32_0 = arith.constant 0 : i32
    %c0_i32_1 = arith.constant 0 : i32
    return %c0_i32, %c0_i32_0 : i32, i32
  }
  func.func @transform_2(%arg0: i32, %arg1: i32) -> (i32, i32) {
    %c0_i32 = arith.constant 0 : i32
    %c0_i32_0 = arith.constant 0 : i32
    %c0_i32_1 = arith.constant 0 : i32
    return %c0_i32, %c0_i32_0 : i32, i32
  }
  func.func @transform_3(%arg0: i32, %arg1: i32) -> (i32, i32) {
    %c0_i32 = arith.constant 0 : i32
    %c0_i32_0 = arith.constant 0 : i32
    %c0_i32_1 = arith.constant 0 : i32
    return %c0_i32, %c0_i32_0 : i32, i32
  }
  func.func @transform_4(%arg0: i32, %arg1: i32) -> (i32, i32) {
    %c0_i32 = arith.constant 0 : i32
    %c0_i32_0 = arith.constant 0 : i32
    %c0_i32_1 = arith.constant 0 : i32
    return %c0_i32, %c0_i32_0 : i32, i32
  }
  func.func @transform_5(%arg0: i32, %arg1: i32) -> (i32, i32) {
    %c0_i32 = arith.constant 0 : i32
    %c0_i32_0 = arith.constant 0 : i32
    return %arg0, %c0_i32 : i32, i32
  }
}

</mosaic_0001>

<llo_original>
// kernel: tpu_custom_call.1
$region0: #{tpu_custom_call.1}
  #allocation0 [shape = 'u32[]', space=smem, size = 0x4, offset = 0x4, fixed_abs, tag = 'smem constant byte address 0x4 - core index']
  #allocation1 [shape = 'u32[144,128]{1,0:T(1,128)}', space=vmem, size = 0x12000, scoped, tag = 'internal scratch']
  #allocation2 [shape = 'f32[2,1280]{1,0:T(2,128)}', space=vmem, size = 0x2800, scoped, tag = 'scratch operand']
  #allocation3 [shape = 'f32[1,1]{1,0:T(1,128)S(1)}', space=vmem, size = 0x200, scoped, tag = 'scoped memory for tpu_custom_call.1']
  %s0 = inlined_call_operand.hbm [shape: bf16[2,16,256], index: 0, kind: input, shape index: {}]
  %s1 = inlined_call_operand.hbm [shape: bf16[256,1280], index: 1, kind: input, shape index: {}]
  %s2 = inlined_call_operand.hbm [shape: f32[1,1280], index: 2, kind: input, shape index: {}]
  %s3 = inlined_call_operand.hbm [shape: f32[1,1280], index: 3, kind: input, shape index: {}]
  %s4 = inlined_call_operand.<no memory space> [shape: f32[1,1], index: 4, kind: input, shape index: {}]
  %s5 = inlined_call_operand.vmem [shape: f32[2,1], index: 5, kind: output, shape index: {}]
  %s6 = sld [smem:[#allocation0]]
  $region54: #{tpu_custom_call.1} parent=0
    _
  %s8 = ssub.s32 1, %s6
  %s9 = scalar_select 0, %s8, %s6
  %v10 = vstv %s4
  %11 = vst [vmem:[#allocation3] sm:$0x1] %v10
  $region1: #{tpu_custom_call.1} parent=0
    #allocation4 [shape = 'u8[16384]{0}', space=vmem, size = 0x4000, scoped, tag = 'input window, operand 0, single buffered']
    #allocation5 [shape = 's32[1]{0}', space=sflag, size = 0x4, scoped, tag = 'scoped memory for tpu_custom_call.1']
    #allocation6 [shape = 'u8[655360]{0}', space=vmem, size = 0xa0000, scoped, tag = 'input window, operand 1, single buffered']
    #allocation7 [shape = 's32[1]{0}', space=sflag, size = 0x4, scoped, tag = 'scoped memory for tpu_custom_call.1']
    #allocation8 [shape = 'u8[5120]{0}', space=vmem, size = 0x1400, scoped, tag = 'input window, operand 2, single buffered']
    #allocation9 [shape = 'u8[5120]{0}', space=vmem, size = 0x1400, scoped, tag = 'input window, operand 3, single buffered']
    #allocation10 [shape = 's32[1]{0}', space=sflag, size = 0x4, scoped, tag = 'scoped memory for tpu_custom_call.1']
    %12 = vsyncpa [#allocation5], 0
    %13 = vsyncpa [#allocation7], 0
    %14 = vsyncpa [#allocation10], 0
    // Predicated region
    $region2: #{tpu_custom_call.1} parent=1 // pred_check
      _
    $region3: #{tpu_custom_call.1} parent=1 // pred_check_branch
      %16 = sbr.rel (0) target = $region5
    $region4: #{tpu_custom_call.1} parent=1 // pred_region
      %s18 = ssub.s32 512, 512
      %19 = vsyncadd [#allocation5], %s18
      %s20 = sshll.u32 [#allocation4], 4
      %s21 = int_to_ptr.vmem [resolvable:$true] %s20
      %26 = dma.hbm_to_vmem [thread:$0]  %s0, 512, %s21, [#allocation5], 128, 128, 8
    $region5: #{tpu_custom_call.1} parent=1 // pred_fallthru
      _
    // Predicated region
    $region6: #{tpu_custom_call.1} parent=1 // pred_check
      _
    $region7: #{tpu_custom_call.1} parent=1 // pred_check_branch
      %28 = sbr.rel (0) target = $region9
    $region8: #{tpu_custom_call.1} parent=1 // pred_region
      %s30 = ssub.s32 20480, 20480
      %31 = vsyncadd [#allocation7], %s30
      %s32 = sshll.u32 [#allocation6], 4
      %s33 = int_to_ptr.vmem [resolvable:$true] %s32
      %38 = dma.hbm_to_vmem [thread:$0]  %s1, 20480, %s33, [#allocation7], 640, 640, 40
    $region9: #{tpu_custom_call.1} parent=1 // pred_fallthru
      _
    // Predicated region
    $region10: #{tpu_custom_call.1} parent=1 // pred_check
      _
    $region11: #{tpu_custom_call.1} parent=1 // pred_check_branch
      %40 = sbr.rel (0) target = $region13
    $region12: #{tpu_custom_call.1} parent=1 // pred_region
      %s42 = ssub.s32 160, 160
      %43 = vsyncadd [#allocation7], %s42
      %s45 = sshll.u32 [#allocation8], 4
      %s46 = int_to_ptr.vmem [resolvable:$true] %s45
      %48 = dma.hbm_to_vmem [thread:$0]  %s2, 160, %s46, [#allocation7]
    $region13: #{tpu_custom_call.1} parent=1 // pred_fallthru
      _
    // Predicated region
    $region14: #{tpu_custom_call.1} parent=1 // pred_check
      _
    $region15: #{tpu_custom_call.1} parent=1 // pred_check_branch
      %50 = sbr.rel (0) target = $region17
    $region16: #{tpu_custom_call.1} parent=1 // pred_region
      %s52 = ssub.s32 160, 160
      %53 = vsyncadd [#allocation10], %s52
      %s55 = sshll.u32 [#allocation9], 4
      %s56 = int_to_ptr.vmem [resolvable:$true] %s55
      %58 = dma.hbm_to_vmem [thread:$0]  %s3, 160, %s56, [#allocation10]
    $region17: #{tpu_custom_call.1} parent=1 // pred_fallthru
      _
    // Predicated region
    $region18: #{tpu_custom_call.1} parent=1 // pred_check
      _
    $region19: #{tpu_custom_call.1} parent=1 // pred_check_branch
      %60 = sbr.rel (0) target = $region21
    $region20: #{tpu_custom_call.1} parent=1 // pred_region
      _
    $region21: #{tpu_custom_call.1} parent=1 // pred_fallthru
      _
    // Predicated region
    $region22: #{tpu_custom_call.1} parent=1 // pred_check
      _
    $region23: #{tpu_custom_call.1} parent=1 // pred_check_branch
      %62 = sbr.rel (0) target = $region25
    $region24: #{tpu_custom_call.1} parent=1 // pred_region
      %63 = dma.done [#allocation5], 512
    $region25: #{tpu_custom_call.1} parent=1 // pred_fallthru
      _
    // Predicated region
    $region26: #{tpu_custom_call.1} parent=1 // pred_check
      _
    $region27: #{tpu_custom_call.1} parent=1 // pred_check_branch
      %65 = sbr.rel (0) target = $region29
    $region28: #{tpu_custom_call.1} parent=1 // pred_region
      %66 = dma.done [#allocation7], 20480
    $region29: #{tpu_custom_call.1} parent=1 // pred_fallthru
      _
    // Predicated region
    $region30: #{tpu_custom_call.1} parent=1 // pred_check
      _
    $region31: #{tpu_custom_call.1} parent=1 // pred_check_branch
      %68 = sbr.rel (0) target = $region33
    $region32: #{tpu_custom_call.1} parent=1 // pred_region
      %69 = dma.done [#allocation7], 160
    $region33: #{tpu_custom_call.1} parent=1 // pred_fallthru
      _
    // Predicated region
    $region34: #{tpu_custom_call.1} parent=1 // pred_check
      _
    $region35: #{tpu_custom_call.1} parent=1 // pred_check_branch
      %71 = sbr.rel (0) target = $region37
    $region36: #{tpu_custom_call.1} parent=1 // pred_region
      %72 = dma.done [#allocation10], 160
    $region37: #{tpu_custom_call.1} parent=1 // pred_fallthru
      _
    %p73 = scmp.eq.s32.totalorder 0, 0
    // Predicated region
    $region38: #{tpu_custom_call.1} parent=1 // pred_check
      %p74 = pneg %p73
    $region39: #{tpu_custom_call.1} parent=1 // pred_check_branch
      %76 = sbr.rel (%p74) target = $region41
    $region40: #{tpu_custom_call.1} parent=1 // pred_region
      %77 = vst [vmem:[#allocation2] sm:$0xff] 0.0
      %78 = vst [vmem:[#allocation2 + $0x8] sm:$0xff] 0.0
      %79 = vst [vmem:[#allocation2 + $0x10] sm:$0xf] 0.0
    $region41: #{tpu_custom_call.1} parent=1 // pred_fallthru
      _
    %v80 = vld [vmem:[#allocation4] sm:$0xff]
    %v81 = vld [vmem:[#allocation4 + $0x8] sm:$0xff]
    %v82 = vld [vmem:[#allocation4 + $0x10] sm:$0xff]
    %v83 = vld [vmem:[#allocation4 + $0x18] sm:$0xff]
    %v84 = vld [vmem:[#allocation6] sm:$0xff]
    %v85 = vld [vmem:[#allocation6 + $0x8] sm:$0xff]
    %v86 = vld [vmem:[#allocation6 + $0x10] sm:$0xff]
    %v87 = vld [vmem:[#allocation6 + $0x18] sm:$0xff]
    %v88 = vld [vmem:[#allocation6 + $0x20] sm:$0xff]
    %v89 = vld [vmem:[#allocation6 + $0x28] sm:$0xff]
    %v90 = vld [vmem:[#allocation6 + $0x30] sm:$0xff]
    %v91 = vld [vmem:[#allocation6 + $0x38] sm:$0xff]
    %v92 = vld [vmem:[#allocation6 + $0x40] sm:$0xff]
    %v93 = vld [vmem:[#allocation6 + $0x48] sm:$0xff]
    %v94 = vld [vmem:[#allocation6 + $0x50] sm:$0xff]
    %v95 = vld [vmem:[#allocation6 + $0x58] sm:$0xff]
    %v96 = vld [vmem:[#allocation6 + $0x60] sm:$0xff]
    %v97 = vld [vmem:[#allocation6 + $0x68] sm:$0xff]
    %v98 = vld [vmem:[#allocation6 + $0x70] sm:$0xff]
    %v99 = vld [vmem:[#allocation6 + $0x78] sm:$0xff]
    %v100 = vld [vmem:[#allocation6 + $0x80] sm:$0xff]
    %v101 = vld [vmem:[#allocation6 + $0x88] sm:$0xff]
    %v102 = vld [vmem:[#allocation6 + $0x90] sm:$0xff]
    %v103 = vld [vmem:[#allocation6 + $0x98] sm:$0xff]
    %v104 = vld [vmem:[#allocation6 + $0xa0] sm:$0xff]
    %v105 = vld [vmem:[#allocation6 + $0xa8] sm:$0xff]
    %v106 = vld [vmem:[#allocation6 + $0xb0] sm:$0xff]
    %v107 = vld [vmem:[#allocation6 + $0xb8] sm:$0xff]
    %v108 = vld [vmem:[#allocation6 + $0xc0] sm:$0xff]
    %v109 = vld [vmem:[#allocation6 + $0xc8] sm:$0xff]
    %v110 = vld [vmem:[#allocation6 + $0xd0] sm:$0xff]
    %v111 = vld [vmem:[#allocation6 + $0xd8] sm:$0xff]
    %v112 = vld [vmem:[#allocation6 + $0xe0] sm:$0xff]
    %v113 = vld [vmem:[#allocation6 + $0xe8] sm:$0xff]
    %v114 = vld [vmem:[#allocation6 + $0xf0] sm:$0xff]
    %v115 = vld [vmem:[#allocation6 + $0xf8] sm:$0xff]
    %v116 = vld [vmem:[#allocation6 + $0x100] sm:$0xff]
    %v117 = vld [vmem:[#allocation6 + $0x108] sm:$0xff]
    %v118 = vld [vmem:[#allocation6 + $0x110] sm:$0xff]
    %v119 = vld [vmem:[#allocation6 + $0x118] sm:$0xff]
    %v120 = vld [vmem:[#allocation6 + $0x120] sm:$0xff]
    %v121 = vld [vmem:[#allocation6 + $0x128] sm:$0xff]
    %v122 = vld [vmem:[#allocation6 + $0x130] sm:$0xff]
    %v123 = vld [vmem:[#allocation6 + $0x138] sm:$0xff]
    %v124 = vld [vmem:[#allocation6 + $0x140] sm:$0xff]
    %v125 = vld [vmem:[#allocation6 + $0x148] sm:$0xff]
    %v126 = vld [vmem:[#allocation6 + $0x150] sm:$0xff]
    %v127 = vld [vmem:[#allocation6 + $0x158] sm:$0xff]
    %v128 = vld [vmem:[#allocation6 + $0x160] sm:$0xff]
    %v129 = vld [vmem:[#allocation6 + $0x168] sm:$0xff]
    %v130 = vld [vmem:[#allocation6 + $0x170] sm:$0xff]
    %v131 = vld [vmem:[#allocation6 + $0x178] sm:$0xff]
    %v132 = vld [vmem:[#allocation6 + $0x180] sm:$0xff]
    %v133 = vld [vmem:[#allocation6 + $0x188] sm:$0xff]
    %v134 = vld [vmem:[#allocation6 + $0x190] sm:$0xff]
    %v135 = vld [vmem:[#allocation6 + $0x198] sm:$0xff]
    %v136 = vld [vmem:[#allocation6 + $0x1a0] sm:$0xff]
    %v137 = vld [vmem:[#allocation6 + $0x1a8] sm:$0xff]
    %v138 = vld [vmem:[#allocation6 + $0x1b0] sm:$0xff]
    %v139 = vld [vmem:[#allocation6 + $0x1b8] sm:$0xff]
    %v140 = vld [vmem:[#allocation6 + $0x1c0] sm:$0xff]
    %v141 = vld [vmem:[#allocation6 + $0x1c8] sm:$0xff]
    %v142 = vld [vmem:[#allocation6 + $0x1d0] sm:$0xff]
    %v143 = vld [vmem:[#allocation6 + $0x1d8] sm:$0xff]
    %v144 = vld [vmem:[#allocation6 + $0x1e0] sm:$0xff]
    %v145 = vld [vmem:[#allocation6 + $0x1e8] sm:$0xff]
    %v146 = vld [vmem:[#allocation6 + $0x1f0] sm:$0xff]
    %v147 = vld [vmem:[#allocation6 + $0x1f8] sm:$0xff]
    %v148 = vld [vmem:[#allocation6 + $0x200] sm:$0xff]
    %v149 = vld [vmem:[#allocation6 + $0x208] sm:$0xff]
    %v150 = vld [vmem:[#allocation6 + $0x210] sm:$0xff]
    %v151 = vld [vmem:[#allocation6 + $0x218] sm:$0xff]
    %v152 = vld [vmem:[#allocation6 + $0x220] sm:$0xff]
    %v153 = vld [vmem:[#allocation6 + $0x228] sm:$0xff]
    %v154 = vld [vmem:[#allocation6 + $0x230] sm:$0xff]
    %v155 = vld [vmem:[#allocation6 + $0x238] sm:$0xff]
    %v156 = vld [vmem:[#allocation6 + $0x240] sm:$0xff]
    %v157 = vld [vmem:[#allocation6 + $0x248] sm:$0xff]
    %v158 = vld [vmem:[#allocation6 + $0x250] sm:$0xff]
    %v159 = vld [vmem:[#allocation6 + $0x258] sm:$0xff]
    %v160 = vld [vmem:[#allocation6 + $0x260] sm:$0xff]
    %v161 = vld [vmem:[#allocation6 + $0x268] sm:$0xff]
    %v162 = vld [vmem:[#allocation6 + $0x270] sm:$0xff]
    %v163 = vld [vmem:[#allocation6 + $0x278] sm:$0xff]
    %v164 = vld [vmem:[#allocation6 + $0x280] sm:$0xff]
    %v165 = vld [vmem:[#allocation6 + $0x288] sm:$0xff]
    %v166 = vld [vmem:[#allocation6 + $0x290] sm:$0xff]
    %v167 = vld [vmem:[#allocation6 + $0x298] sm:$0xff]
    %v168 = vld [vmem:[#allocation6 + $0x2a0] sm:$0xff]
    %v169 = vld [vmem:[#allocation6 + $0x2a8] sm:$0xff]
    %v170 = vld [vmem:[#allocation6 + $0x2b0] sm:$0xff]
    %v171 = vld [vmem:[#allocation6 + $0x2b8] sm:$0xff]
    %v172 = vld [vmem:[#allocation6 + $0x2c0] sm:$0xff]
    %v173 = vld [vmem:[#allocation6 + $0x2c8] sm:$0xff]
    %v174 = vld [vmem:[#allocation6 + $0x2d0] sm:$0xff]
    %v175 = vld [vmem:[#allocation6 + $0x2d8] sm:$0xff]
    %v176 = vld [vmem:[#allocation6 + $0x2e0] sm:$0xff]
    %v177 = vld [vmem:[#allocation6 + $0x2e8] sm:$0xff]
    %v178 = vld [vmem:[#allocation6 + $0x2f0] sm:$0xff]
    %v179 = vld [vmem:[#allocation6 + $0x2f8] sm:$0xff]
    %v180 = vld [vmem:[#allocation6 + $0x300] sm:$0xff]
    %v181 = vld [vmem:[#allocation6 + $0x308] sm:$0xff]
    %v182 = vld [vmem:[#allocation6 + $0x310] sm:$0xff]
    %v183 = vld [vmem:[#allocation6 + $0x318] sm:$0xff]
    %v184 = vld [vmem:[#allocation6 + $0x320] sm:$0xff]
    %v185 = vld [vmem:[#allocation6 + $0x328] sm:$0xff]
    %v186 = vld [vmem:[#allocation6 + $0x330] sm:$0xff]
    %v187 = vld [vmem:[#allocation6 + $0x338] sm:$0xff]
    %v188 = vld [vmem:[#allocation6 + $0x340] sm:$0xff]
    %v189 = vld [vmem:[#allocation6 + $0x348] sm:$0xff]
    %v190 = vld [vmem:[#allocation6 + $0x350] sm:$0xff]
    %v191 = vld [vmem:[#allocation6 + $0x358] sm:$0xff]
    %v192 = vld [vmem:[#allocation6 + $0x360] sm:$0xff]
    %v193 = vld [vmem:[#allocation6 + $0x368] sm:$0xff]
    %v194 = vld [vmem:[#allocation6 + $0x370] sm:$0xff]
    %v195 = vld [vmem:[#allocation6 + $0x378] sm:$0xff]
    %v196 = vld [vmem:[#allocation6 + $0x380] sm:$0xff]
    %v197 = vld [vmem:[#allocation6 + $0x388] sm:$0xff]
    %v198 = vld [vmem:[#allocation6 + $0x390] sm:$0xff]
    %v199 = vld [vmem:[#allocation6 + $0x398] sm:$0xff]
    %v200 = vld [vmem:[#allocation6 + $0x3a0] sm:$0xff]
    %v201 = vld [vmem:[#allocation6 + $0x3a8] sm:$0xff]
    %v202 = vld [vmem:[#allocation6 + $0x3b0] sm:$0xff]
    %v203 = vld [vmem:[#allocation6 + $0x3b8] sm:$0xff]
    %v204 = vld [vmem:[#allocation6 + $0x3c0] sm:$0xff]
    %v205 = vld [vmem:[#allocation6 + $0x3c8] sm:$0xff]
    %v206 = vld [vmem:[#allocation6 + $0x3d0] sm:$0xff]
    %v207 = vld [vmem:[#allocation6 + $0x3d8] sm:$0xff]
    %v208 = vld [vmem:[#allocation6 + $0x3e0] sm:$0xff]
    %v209 = vld [vmem:[#allocation6 + $0x3e8] sm:$0xff]
    %v210 = vld [vmem:[#allocation6 + $0x3f0] sm:$0xff]
    %v211 = vld [vmem:[#allocation6 + $0x3f8] sm:$0xff]
    %v212 = vld [vmem:[#allocation6 + $0x400] sm:$0xff]
    %v213 = vld [vmem:[#allocation6 + $0x408] sm:$0xff]
    %v214 = vld [vmem:[#allocation6 + $0x410] sm:$0xff]
    %v215 = vld [vmem:[#allocation6 + $0x418] sm:$0xff]
    %v216 = vld [vmem:[#allocation6 + $0x420] sm:$0xff]
    %v217 = vld [vmem:[#allocation6 + $0x428] sm:$0xff]
    %v218 = vld [vmem:[#allocation6 + $0x430] sm:$0xff]
    %v219 = vld [vmem:[#allocation6 + $0x438] sm:$0xff]
    %v220 = vld [vmem:[#allocation6 + $0x440] sm:$0xff]
    %v221 = vld [vmem:[#allocation6 + $0x448] sm:$0xff]
    %v222 = vld [vmem:[#allocation6 + $0x450] sm:$0xff]
    %v223 = vld [vmem:[#allocation6 + $0x458] sm:$0xff]
    %v224 = vld [vmem:[#allocation6 + $0x460] sm:$0xff]
    %v225 = vld [vmem:[#allocation6 + $0x468] sm:$0xff]
    %v226 = vld [vmem:[#allocation6 + $0x470] sm:$0xff]
    %v227 = vld [vmem:[#allocation6 + $0x478] sm:$0xff]
    %v228 = vld [vmem:[#allocation6 + $0x480] sm:$0xff]
    %v229 = vld [vmem:[#allocation6 + $0x488] sm:$0xff]
    %v230 = vld [vmem:[#allocation6 + $0x490] sm:$0xff]
    %v231 = vld [vmem:[#allocation6 + $0x498] sm:$0xff]
    %v232 = vld [vmem:[#allocation6 + $0x4a0] sm:$0xff]
    %v233 = vld [vmem:[#allocation6 + $0x4a8] sm:$0xff]
    %v234 = vld [vmem:[#allocation6 + $0x4b0] sm:$0xff]
    %v235 = vld [vmem:[#allocation6 + $0x4b8] sm:$0xff]
    %v236 = vld [vmem:[#allocation6 + $0x4c0] sm:$0xff]
    %v237 = vld [vmem:[#allocation6 + $0x4c8] sm:$0xff]
    %v238 = vld [vmem:[#allocation6 + $0x4d0] sm:$0xff]
    %v239 = vld [vmem:[#allocation6 + $0x4d8] sm:$0xff]
    %v240 = vld [vmem:[#allocation6 + $0x4e0] sm:$0xff]
    %v241 = vld [vmem:[#allocation6 + $0x4e8] sm:$0xff]
    %v242 = vld [vmem:[#allocation6 + $0x4f0] sm:$0xff]
    %v243 = vld [vmem:[#allocation6 + $0x4f8] sm:$0xff]
    %v244 = vld [vmem:[#allocation8] sm:$0xff]
    %v245 = vld [vmem:[#allocation8 + $0x8] sm:$0x3]
    %v248 = vlaneseq
    %v249 = vshrl.u32 %v248, 7
    %v250 = vsub.s32 0, %v249
    %v251 = vrot.slane %v244, %v250
    %v252 = vlaneseq
    %v253 = vshrl.u32 %v252, 7
    %v254 = vsub.s32 1, %v253
    %v255 = vrot.slane %v244, %v254
    %v256 = vlaneseq
    %v257 = vshrl.u32 %v256, 7
    %v258 = vsub.s32 2, %v257
    %v259 = vrot.slane %v244, %v258
    %v260 = vlaneseq
    %v261 = vshrl.u32 %v260, 7
    %v262 = vsub.s32 3, %v261
    %v263 = vrot.slane %v244, %v262
    %v264 = vlaneseq
    %v265 = vshrl.u32 %v264, 7
    %v266 = vsub.s32 4, %v265
    %v267 = vrot.slane %v244, %v266
    %v268 = vlaneseq
    %v269 = vshrl.u32 %v268, 7
    %v270 = vsub.s32 5, %v269
    %v271 = vrot.slane %v244, %v270
    %v272 = vlaneseq
    %v273 = vshrl.u32 %v272, 7
    %v274 = vsub.s32 6, %v273
    %v275 = vrot.slane %v244, %v274
    %v276 = vlaneseq
    %v277 = vshrl.u32 %v276, 7
    %v278 = vsub.s32 7, %v277
    %v279 = vrot.slane %v244, %v278
    %v280 = vlaneseq
    %v281 = vshrl.u32 %v280, 7
    %v282 = vsub.s32 0, %v281
    %v283 = vrot.slane %v245, %v282
    %v284 = vlaneseq
    %v285 = vshrl.u32 %v284, 7
    %v286 = vsub.s32 1, %v285
    %v287 = vrot.slane %v245, %v286
    %v302 = vunpack.c.l.b16 %v80
    %v303 = vunpack.c.h.b16 %v80
    %v304 = vunpack.c.l.b16 %v81
    %v305 = vunpack.c.h.b16 %v81
    %v306 = vunpack.c.l.b16 %v82
    %v307 = vunpack.c.h.b16 %v82
    %v308 = vunpack.c.l.b16 %v83
    %v309 = vunpack.c.h.b16 %v83
    %v310 = vpack.c.b16 %v304, %v302
    %v311 = vpack.c.b16 %v305, %v303
    %v312 = vpack.c.b16 %v308, %v306
    %v313 = vpack.c.b16 %v309, %v307
    %v478 = vunpack.c.l.b16 %v84
    %v479 = vunpack.c.h.b16 %v84
    %v480 = vunpack.c.l.b16 %v85
    %v481 = vunpack.c.h.b16 %v85
    %v482 = vunpack.c.l.b16 %v86
    %v483 = vunpack.c.h.b16 %v86
    %v484 = vunpack.c.l.b16 %v87
    %v485 = vunpack.c.h.b16 %v87
    %v486 = vunpack.c.l.b16 %v88
    %v487 = vunpack.c.h.b16 %v88
    %v488 = vunpack.c.l.b16 %v89
    %v489 = vunpack.c.h.b16 %v89
    %v490 = vunpack.c.l.b16 %v90
    %v491 = vunpack.c.h.b16 %v90
    %v492 = vunpack.c.l.b16 %v91
    %v493 = vunpack.c.h.b16 %v91
    %v494 = vunpack.c.l.b16 %v92
    %v495 = vunpack.c.h.b16 %v92
    %v496 = vunpack.c.l.b16 %v93
    %v497 = vunpack.c.h.b16 %v93
    %v498 = vunpack.c.l.b16 %v94
    %v499 = vunpack.c.h.b16 %v94
    %v500 = vunpack.c.l.b16 %v95
    %v501 = vunpack.c.h.b16 %v95
    %v502 = vunpack.c.l.b16 %v96
    %v503 = vunpack.c.h.b16 %v96
    %v504 = vunpack.c.l.b16 %v97
    %v505 = vunpack.c.h.b16 %v97
    %v506 = vunpack.c.l.b16 %v98
    %v507 = vunpack.c.h.b16 %v98
    %v508 = vunpack.c.l.b16 %v99
    %v509 = vunpack.c.h.b16 %v99
    %v510 = vunpack.c.l.b16 %v100
    %v511 = vunpack.c.h.b16 %v100
    %v512 = vunpack.c.l.b16 %v101
    %v513 = vunpack.c.h.b16 %v101
    %v514 = vunpack.c.l.b16 %v102
    %v515 = vunpack.c.h.b16 %v102
    %v516 = vunpack.c.l.b16 %v103
    %v517 = vunpack.c.h.b16 %v103
    %v518 = vunpack.c.l.b16 %v104
    %v519 = vunpack.c.h.b16 %v104
    %v520 = vunpack.c.l.b16 %v105
    %v521 = vunpack.c.h.b16 %v105
    %v522 = vunpack.c.l.b16 %v106
    %v523 = vunpack.c.h.b16 %v106
    %v524 = vunpack.c.l.b16 %v107
    %v525 = vunpack.c.h.b16 %v107
    %v526 = vunpack.c.l.b16 %v108
    %v527 = vunpack.c.h.b16 %v108
    %v528 = vunpack.c.l.b16 %v109
    %v529 = vunpack.c.h.b16 %v109
    %v530 = vunpack.c.l.b16 %v110
    %v531 = vunpack.c.h.b16 %v110
    %v532 = vunpack.c.l.b16 %v111
    %v533 = vunpack.c.h.b16 %v111
    %v534 = vunpack.c.l.b16 %v112
    %v535 = vunpack.c.h.b16 %v112
    %v536 = vunpack.c.l.b16 %v113
    %v537 = vunpack.c.h.b16 %v113
    %v538 = vunpack.c.l.b16 %v114
    %v539 = vunpack.c.h.b16 %v114
    %v540 = vunpack.c.l.b16 %v115
    %v541 = vunpack.c.h.b16 %v115
    %v542 = vunpack.c.l.b16 %v116
    %v543 = vunpack.c.h.b16 %v116
    %v544 = vunpack.c.l.b16 %v117
    %v545 = vunpack.c.h.b16 %v117
    %v546 = vunpack.c.l.b16 %v118
    %v547 = vunpack.c.h.b16 %v118
    %v548 = vunpack.c.l.b16 %v119
    %v549 = vunpack.c.h.b16 %v119
    %v550 = vunpack.c.l.b16 %v120
    %v551 = vunpack.c.h.b16 %v120
    %v552 = vunpack.c.l.b16 %v121
    %v553 = vunpack.c.h.b16 %v121
    %v554 = vunpack.c.l.b16 %v122
    %v555 = vunpack.c.h.b16 %v122
    %v556 = vunpack.c.l.b16 %v123
    %v557 = vunpack.c.h.b16 %v123
    %v558 = vunpack.c.l.b16 %v124
    %v559 = vunpack.c.h.b16 %v124
    %v560 = vunpack.c.l.b16 %v125
    %v561 = vunpack.c.h.b16 %v125
    %v562 = vunpack.c.l.b16 %v126
    %v563 = vunpack.c.h.b16 %v126
    %v564 = vunpack.c.l.b16 %v127
    %v565 = vunpack.c.h.b16 %v127
    %v566 = vunpack.c.l.b16 %v128
    %v567 = vunpack.c.h.b16 %v128
    %v568 = vunpack.c.l.b16 %v129
    %v569 = vunpack.c.h.b16 %v129
    %v570 = vunpack.c.l.b16 %v130
    %v571 = vunpack.c.h.b16 %v130
    %v572 = vunpack.c.l.b16 %v131
    %v573 = vunpack.c.h.b16 %v131
    %v574 = vunpack.c.l.b16 %v132
    %v575 = vunpack.c.h.b16 %v132
    %v576 = vunpack.c.l.b16 %v133
    %v577 = vunpack.c.h.b16 %v133
    %v578 = vunpack.c.l.b16 %v134
    %v579 = vunpack.c.h.b16 %v134
    %v580 = vunpack.c.l.b16 %v135
    %v581 = vunpack.c.h.b16 %v135
    %v582 = vunpack.c.l.b16 %v136
    %v583 = vunpack.c.h.b16 %v136
    %v584 = vunpack.c.l.b16 %v137
    %v585 = vunpack.c.h.b16 %v137
    %v586 = vunpack.c.l.b16 %v138
    %v587 = vunpack.c.h.b16 %v138
    %v588 = vunpack.c.l.b16 %v139
    %v589 = vunpack.c.h.b16 %v139
    %v590 = vunpack.c.l.b16 %v140
    %v591 = vunpack.c.h.b16 %v140
    %v592 = vunpack.c.l.b16 %v141
    %v593 = vunpack.c.h.b16 %v141
    %v594 = vunpack.c.l.b16 %v142
    %v595 = vunpack.c.h.b16 %v142
    %v596 = vunpack.c.l.b16 %v143
    %v597 = vunpack.c.h.b16 %v143
    %v598 = vunpack.c.l.b16 %v144
    %v599 = vunpack.c.h.b16 %v144
    %v600 = vunpack.c.l.b16 %v145
    %v601 = vunpack.c.h.b16 %v145
    %v602 = vunpack.c.l.b16 %v146
    %v603 = vunpack.c.h.b16 %v146
    %v604 = vunpack.c.l.b16 %v147
    %v605 = vunpack.c.h.b16 %v147
    %v606 = vunpack.c.l.b16 %v148
    %v607 = vunpack.c.h.b16 %v148
    %v608 = vunpack.c.l.b16 %v149
    %v609 = vunpack.c.h.b16 %v149
    %v610 = vunpack.c.l.b16 %v150
    %v611 = vunpack.c.h.b16 %v150
    %v612 = vunpack.c.l.b16 %v151
    %v613 = vunpack.c.h.b16 %v151
    %v614 = vunpack.c.l.b16 %v152
    %v615 = vunpack.c.h.b16 %v152
    %v616 = vunpack.c.l.b16 %v153
    %v617 = vunpack.c.h.b16 %v153
    %v618 = vunpack.c.l.b16 %v154
    %v619 = vunpack.c.h.b16 %v154
    %v620 = vunpack.c.l.b16 %v155
    %v621 = vunpack.c.h.b16 %v155
    %v622 = vunpack.c.l.b16 %v156
    %v623 = vunpack.c.h.b16 %v156
    %v624 = vunpack.c.l.b16 %v157
    %v625 = vunpack.c.h.b16 %v157
    %v626 = vunpack.c.l.b16 %v158
    %v627 = vunpack.c.h.b16 %v158
    %v628 = vunpack.c.l.b16 %v159
    %v629 = vunpack.c.h.b16 %v159
    %v630 = vunpack.c.l.b16 %v160
    %v631 = vunpack.c.h.b16 %v160
    %v632 = vunpack.c.l.b16 %v161
    %v633 = vunpack.c.h.b16 %v161
    %v634 = vunpack.c.l.b16 %v162
    %v635 = vunpack.c.h.b16 %v162
    %v636 = vunpack.c.l.b16 %v163
    %v637 = vunpack.c.h.b16 %v163
    %v638 = vunpack.c.l.b16 %v164
    %v639 = vunpack.c.h.b16 %v164
    %v640 = vunpack.c.l.b16 %v165
    %v641 = vunpack.c.h.b16 %v165
    %v642 = vunpack.c.l.b16 %v166
    %v643 = vunpack.c.h.b16 %v166
    %v644 = vunpack.c.l.b16 %v167
    %v645 = vunpack.c.h.b16 %v167
    %v646 = vunpack.c.l.b16 %v168
    %v647 = vunpack.c.h.b16 %v168
    %v648 = vunpack.c.l.b16 %v169
    %v649 = vunpack.c.h.b16 %v169
    %v650 = vunpack.c.l.b16 %v170
    %v651 = vunpack.c.h.b16 %v170
    %v652 = vunpack.c.l.b16 %v171
    %v653 = vunpack.c.h.b16 %v171
    %v654 = vunpack.c.l.b16 %v172
    %v655 = vunpack.c.h.b16 %v172
    %v656 = vunpack.c.l.b16 %v173
    %v657 = vunpack.c.h.b16 %v173
    %v658 = vunpack.c.l.b16 %v174
    %v659 = vunpack.c.h.b16 %v174
    %v660 = vunpack.c.l.b16 %v175
    %v661 = vunpack.c.h.b16 %v175
    %v662 = vunpack.c.l.b16 %v176
    %v663 = vunpack.c.h.b16 %v176
    %v664 = vunpack.c.l.b16 %v177
    %v665 = vunpack.c.h.b16 %v177
    %v666 = vunpack.c.l.b16 %v178
    %v667 = vunpack.c.h.b16 %v178
    %v668 = vunpack.c.l.b16 %v179
    %v669 = vunpack.c.h.b16 %v179
    %v670 = vunpack.c.l.b16 %v180
    %v671 = vunpack.c.h.b16 %v180
    %v672 = vunpack.c.l.b16 %v181
    %v673 = vunpack.c.h.b16 %v181
    %v674 = vunpack.c.l.b16 %v182
    %v675 = vunpack.c.h.b16 %v182
    %v676 = vunpack.c.l.b16 %v183
    %v677 = vunpack.c.h.b16 %v183
    %v678 = vunpack.c.l.b16 %v184
    %v679 = vunpack.c.h.b16 %v184
    %v680 = vunpack.c.l.b16 %v185
    %v681 = vunpack.c.h.b16 %v185
    %v682 = vunpack.c.l.b16 %v186
    %v683 = vunpack.c.h.b16 %v186
    %v684 = vunpack.c.l.b16 %v187
    %v685 = vunpack.c.h.b16 %v187
    %v686 = vunpack.c.l.b16 %v188
    %v687 = vunpack.c.h.b16 %v188
    %v688 = vunpack.c.l.b16 %v189
    %v689 = vunpack.c.h.b16 %v189
    %v690 = vunpack.c.l.b16 %v190
    %v691 = vunpack.c.h.b16 %v190
    %v692 = vunpack.c.l.b16 %v191
    %v693 = vunpack.c.h.b16 %v191
    %v694 = vunpack.c.l.b16 %v192
    %v695 = vunpack.c.h.b16 %v192
    %v696 = vunpack.c.l.b16 %v193
    %v697 = vunpack.c.h.b16 %v193
    %v698 = vunpack.c.l.b16 %v194
    %v699 = vunpack.c.h.b16 %v194
    %v700 = vunpack.c.l.b16 %v195
    %v701 = vunpack.c.h.b16 %v195
    %v702 = vunpack.c.l.b16 %v196
    %v703 = vunpack.c.h.b16 %v196
    %v704 = vunpack.c.l.b16 %v197
    %v705 = vunpack.c.h.b16 %v197
    %v706 = vunpack.c.l.b16 %v198
    %v707 = vunpack.c.h.b16 %v198
    %v708 = vunpack.c.l.b16 %v199
    %v709 = vunpack.c.h.b16 %v199
    %v710 = vunpack.c.l.b16 %v200
    %v711 = vunpack.c.h.b16 %v200
    %v712 = vunpack.c.l.b16 %v201
    %v713 = vunpack.c.h.b16 %v201
    %v714 = vunpack.c.l.b16 %v202
    %v715 = vunpack.c.h.b16 %v202
    %v716 = vunpack.c.l.b16 %v203
    %v717 = vunpack.c.h.b16 %v203
    %v718 = vunpack.c.l.b16 %v204
    %v719 = vunpack.c.h.b16 %v204
    %v720 = vunpack.c.l.b16 %v205
    %v721 = vunpack.c.h.b16 %v205
    %v722 = vunpack.c.l.b16 %v206
    %v723 = vunpack.c.h.b16 %v206
    %v724 = vunpack.c.l.b16 %v207
    %v725 = vunpack.c.h.b16 %v207
    %v726 = vunpack.c.l.b16 %v208
    %v727 = vunpack.c.h.b16 %v208
    %v728 = vunpack.c.l.b16 %v209
    %v729 = vunpack.c.h.b16 %v209
    %v730 = vunpack.c.l.b16 %v210
    %v731 = vunpack.c.h.b16 %v210
    %v732 = vunpack.c.l.b16 %v211
    %v733 = vunpack.c.h.b16 %v211
    %v734 = vunpack.c.l.b16 %v212
    %v735 = vunpack.c.h.b16 %v212
    %v736 = vunpack.c.l.b16 %v213
    %v737 = vunpack.c.h.b16 %v213
    %v738 = vunpack.c.l.b16 %v214
    %v739 = vunpack.c.h.b16 %v214
    %v740 = vunpack.c.l.b16 %v215
    %v741 = vunpack.c.h.b16 %v215
    %v742 = vunpack.c.l.b16 %v216
    %v743 = vunpack.c.h.b16 %v216
    %v744 = vunpack.c.l.b16 %v217
    %v745 = vunpack.c.h.b16 %v217
    %v746 = vunpack.c.l.b16 %v218
    %v747 = vunpack.c.h.b16 %v218
    %v748 = vunpack.c.l.b16 %v219
    %v749 = vunpack.c.h.b16 %v219
    %v750 = vunpack.c.l.b16 %v220
    %v751 = vunpack.c.h.b16 %v220
    %v752 = vunpack.c.l.b16 %v221
    %v753 = vunpack.c.h.b16 %v221
    %v754 = vunpack.c.l.b16 %v222
    %v755 = vunpack.c.h.b16 %v222
    %v756 = vunpack.c.l.b16 %v223
    %v757 = vunpack.c.h.b16 %v223
    %v758 = vunpack.c.l.b16 %v224
    %v759 = vunpack.c.h.b16 %v224
    %v760 = vunpack.c.l.b16 %v225
    %v761 = vunpack.c.h.b16 %v225
    %v762 = vunpack.c.l.b16 %v226
    %v763 = vunpack.c.h.b16 %v226
    %v764 = vunpack.c.l.b16 %v227
    %v765 = vunpack.c.h.b16 %v227
    %v766 = vunpack.c.l.b16 %v228
    %v767 = vunpack.c.h.b16 %v228
    %v768 = vunpack.c.l.b16 %v229
    %v769 = vunpack.c.h.b16 %v229
    %v770 = vunpack.c.l.b16 %v230
    %v771 = vunpack.c.h.b16 %v230
    %v772 = vunpack.c.l.b16 %v231
    %v773 = vunpack.c.h.b16 %v231
    %v774 = vunpack.c.l.b16 %v232
    %v775 = vunpack.c.h.b16 %v232
    %v776 = vunpack.c.l.b16 %v233
    %v777 = vunpack.c.h.b16 %v233
    %v778 = vunpack.c.l.b16 %v234
    %v779 = vunpack.c.h.b16 %v234
    %v780 = vunpack.c.l.b16 %v235
    %v781 = vunpack.c.h.b16 %v235
    %v782 = vunpack.c.l.b16 %v236
    %v783 = vunpack.c.h.b16 %v236
    %v784 = vunpack.c.l.b16 %v237
    %v785 = vunpack.c.h.b16 %v237
    %v786 = vunpack.c.l.b16 %v238
    %v787 = vunpack.c.h.b16 %v238
    %v788 = vunpack.c.l.b16 %v239
    %v789 = vunpack.c.h.b16 %v239
    %v790 = vunpack.c.l.b16 %v240
    %v791 = vunpack.c.h.b16 %v240
    %v792 = vunpack.c.l.b16 %v241
    %v793 = vunpack.c.h.b16 %v241
    %v794 = vunpack.c.l.b16 %v242
    %v795 = vunpack.c.h.b16 %v242
    %v796 = vunpack.c.l.b16 %v243
    %v797 = vunpack.c.h.b16 %v243
    %v798 = vpack.c.b16 %v488, %v478
    %v799 = vpack.c.b16 %v489, %v479
    %v800 = vpack.c.b16 %v490, %v480
    %v801 = vpack.c.b16 %v491, %v481
    %v802 = vpack.c.b16 %v492, %v482
    %v803 = vpack.c.b16 %v493, %v483
    %v804 = vpack.c.b16 %v494, %v484
    %v805 = vpack.c.b16 %v495, %v485
    %v806 = vpack.c.b16 %v496, %v486
    %v807 = vpack.c.b16 %v497, %v487
    %v808 = vpack.c.b16 %v508, %v498
    %v809 = vpack.c.b16 %v509, %v499
    %v810 = vpack.c.b16 %v510, %v500
    %v811 = vpack.c.b16 %v511, %v501
    %v812 = vpack.c.b16 %v512, %v502
    %v813 = vpack.c.b16 %v513, %v503
    %v814 = vpack.c.b16 %v514, %v504
    %v815 = vpack.c.b16 %v515, %v505
    %v816 = vpack.c.b16 %v516, %v506
    %v817 = vpack.c.b16 %v517, %v507
    %v818 = vpack.c.b16 %v528, %v518
    %v819 = vpack.c.b16 %v529, %v519
    %v820 = vpack.c.b16 %v530, %v520
    %v821 = vpack.c.b16 %v531, %v521
    %v822 = vpack.c.b16 %v532, %v522
    %v823 = vpack.c.b16 %v533, %v523
    %v824 = vpack.c.b16 %v534, %v524
    %v825 = vpack.c.b16 %v535, %v525
    %v826 = vpack.c.b16 %v536, %v526
    %v827 = vpack.c.b16 %v537, %v527
    %v828 = vpack.c.b16 %v548, %v538
    %v829 = vpack.c.b16 %v549, %v539
    %v830 = vpack.c.b16 %v550, %v540
    %v831 = vpack.c.b16 %v551, %v541
    %v832 = vpack.c.b16 %v552, %v542
    %v833 = vpack.c.b16 %v553, %v543
    %v834 = vpack.c.b16 %v554, %v544
    %v835 = vpack.c.b16 %v555, %v545
    %v836 = vpack.c.b16 %v556, %v546
    %v837 = vpack.c.b16 %v557, %v547
    %v838 = vpack.c.b16 %v568, %v558
    %v839 = vpack.c.b16 %v569, %v559
    %v840 = vpack.c.b16 %v570, %v560
    %v841 = vpack.c.b16 %v571, %v561
    %v842 = vpack.c.b16 %v572, %v562
    %v843 = vpack.c.b16 %v573, %v563
    %v844 = vpack.c.b16 %v574, %v564
    %v845 = vpack.c.b16 %v575, %v565
    %v846 = vpack.c.b16 %v576, %v566
    %v847 = vpack.c.b16 %v577, %v567
    %v848 = vpack.c.b16 %v588, %v578
    %v849 = vpack.c.b16 %v589, %v579
    %v850 = vpack.c.b16 %v590, %v580
    %v851 = vpack.c.b16 %v591, %v581
    %v852 = vpack.c.b16 %v592, %v582
    %v853 = vpack.c.b16 %v593, %v583
    %v854 = vpack.c.b16 %v594, %v584
    %v855 = vpack.c.b16 %v595, %v585
    %v856 = vpack.c.b16 %v596, %v586
    %v857 = vpack.c.b16 %v597, %v587
    %v858 = vpack.c.b16 %v608, %v598
    %v859 = vpack.c.b16 %v609, %v599
    %v860 = vpack.c.b16 %v610, %v600
    %v861 = vpack.c.b16 %v611, %v601
    %v862 = vpack.c.b16 %v612, %v602
    %v863 = vpack.c.b16 %v613, %v603
    %v864 = vpack.c.b16 %v614, %v604
    %v865 = vpack.c.b16 %v615, %v605
    %v866 = vpack.c.b16 %v616, %v606
    %v867 = vpack.c.b16 %v617, %v607
    %v868 = vpack.c.b16 %v628, %v618
    %v869 = vpack.c.b16 %v629, %v619
    %v870 = vpack.c.b16 %v630, %v620
    %v871 = vpack.c.b16 %v631, %v621
    %v872 = vpack.c.b16 %v632, %v622
    %v873 = vpack.c.b16 %v633, %v623
    %v874 = vpack.c.b16 %v634, %v624
    %v875 = vpack.c.b16 %v635, %v625
    %v876 = vpack.c.b16 %v636, %v626
    %v877 = vpack.c.b16 %v637, %v627
    %v878 = vpack.c.b16 %v648, %v638
    %v879 = vpack.c.b16 %v649, %v639
    %v880 = vpack.c.b16 %v650, %v640
    %v881 = vpack.c.b16 %v651, %v641
    %v882 = vpack.c.b16 %v652, %v642
    %v883 = vpack.c.b16 %v653, %v643
    %v884 = vpack.c.b16 %v654, %v644
    %v885 = vpack.c.b16 %v655, %v645
    %v886 = vpack.c.b16 %v656, %v646
    %v887 = vpack.c.b16 %v657, %v647
    %v888 = vpack.c.b16 %v668, %v658
    %v889 = vpack.c.b16 %v669, %v659
    %v890 = vpack.c.b16 %v670, %v660
    %v891 = vpack.c.b16 %v671, %v661
    %v892 = vpack.c.b16 %v672, %v662
    %v893 = vpack.c.b16 %v673, %v663
    %v894 = vpack.c.b16 %v674, %v664
    %v895 = vpack.c.b16 %v675, %v665
    %v896 = vpack.c.b16 %v676, %v666
    %v897 = vpack.c.b16 %v677, %v667
    %v898 = vpack.c.b16 %v688, %v678
    %v899 = vpack.c.b16 %v689, %v679
    %v900 = vpack.c.b16 %v690, %v680
    %v901 = vpack.c.b16 %v691, %v681
    %v902 = vpack.c.b16 %v692, %v682
    %v903 = vpack.c.b16 %v693, %v683
    %v904 = vpack.c.b16 %v694, %v684
    %v905 = vpack.c.b16 %v695, %v685
    %v906 = vpack.c.b16 %v696, %v686
    %v907 = vpack.c.b16 %v697, %v687
    %v908 = vpack.c.b16 %v708, %v698
    %v909 = vpack.c.b16 %v709, %v699
    %v910 = vpack.c.b16 %v710, %v700
    %v911 = vpack.c.b16 %v711, %v701
    %v912 = vpack.c.b16 %v712, %v702
    %v913 = vpack.c.b16 %v713, %v703
    %v914 = vpack.c.b16 %v714, %v704
    %v915 = vpack.c.b16 %v715, %v705
    %v916 = vpack.c.b16 %v716, %v706
    %v917 = vpack.c.b16 %v717, %v707
    %v918 = vpack.c.b16 %v728, %v718
    %v919 = vpack.c.b16 %v729, %v719
    %v920 = vpack.c.b16 %v730, %v720
    %v921 = vpack.c.b16 %v731, %v721
    %v922 = vpack.c.b16 %v732, %v722
    %v923 = vpack.c.b16 %v733, %v723
    %v924 = vpack.c.b16 %v734, %v724
    %v925 = vpack.c.b16 %v735, %v725
    %v926 = vpack.c.b16 %v736, %v726
    %v927 = vpack.c.b16 %v737, %v727
    %v928 = vpack.c.b16 %v748, %v738
    %v929 = vpack.c.b16 %v749, %v739
    %v930 = vpack.c.b16 %v750, %v740
    %v931 = vpack.c.b16 %v751, %v741
    %v932 = vpack.c.b16 %v752, %v742
    %v933 = vpack.c.b16 %v753, %v743
    %v934 = vpack.c.b16 %v754, %v744
    %v935 = vpack.c.b16 %v755, %v745
    %v936 = vpack.c.b16 %v756, %v746
    %v937 = vpack.c.b16 %v757, %v747
    %v938 = vpack.c.b16 %v768, %v758
    %v939 = vpack.c.b16 %v769, %v759
    %v940 = vpack.c.b16 %v770, %v760
    %v941 = vpack.c.b16 %v771, %v761
    %v942 = vpack.c.b16 %v772, %v762
    %v943 = vpack.c.b16 %v773, %v763
    %v944 = vpack.c.b16 %v774, %v764
    %v945 = vpack.c.b16 %v775, %v765
    %v946 = vpack.c.b16 %v776, %v766
    %v947 = vpack.c.b16 %v777, %v767
    %v948 = vpack.c.b16 %v788, %v778
    %v949 = vpack.c.b16 %v789, %v779
    %v950 = vpack.c.b16 %v790, %v780
    %v951 = vpack.c.b16 %v791, %v781
    %v952 = vpack.c.b16 %v792, %v782
    %v953 = vpack.c.b16 %v793, %v783
    %v954 = vpack.c.b16 %v794, %v784
    %v955 = vpack.c.b16 %v795, %v785
    %v956 = vpack.c.b16 %v796, %v786
    %v957 = vpack.c.b16 %v797, %v787
    %1118 = vmatprep.subr.bf16.mxu0 %v869
    %1119 = vmatpush1.bf16.msra.mxu0 %v868
    %1120 = vmatprep.subr.bf16.mxu0 %v859
    %1121 = vmatpush1.bf16.msra.mxu0 %v858
    %1122 = vmatprep.subr.bf16.mxu0 %v849
    %1123 = vmatpush1.bf16.msra.mxu0 %v848
    %1124 = vmatprep.subr.bf16.mxu0 %v839
    %1125 = vmatpush1.bf16.msra.mxu0 %v838
    %1126 = vmatprep.subr.bf16.mxu0 %v829
    %1127 = vmatpush1.bf16.msra.mxu0 %v828
    %1128 = vmatprep.subr.bf16.mxu0 %v819
    %1129 = vmatpush1.bf16.msra.mxu0 %v818
    %1130 = vmatprep.subr.bf16.mxu0 %v809
    %1131 = vmatpush1.bf16.msra.mxu0 %v808
    %1132 = vmatprep.subr.bf16.mxu0 %v799
    %1133 = vmatpush1.bf16.msra.mxu0 %v798
    %1134 = vmatprep.subr.bf16.mxu0 %v949
    %1135 = vmatpush2.bf16.msra.mxu0 %v948
    %1136 = vmatprep.subr.bf16.mxu0 %v939
    %1137 = vmatpush2.bf16.msra.mxu0 %v938
    %1138 = vmatprep.subr.bf16.mxu0 %v929
    %1139 = vmatpush2.bf16.msra.mxu0 %v928
    %1140 = vmatprep.subr.bf16.mxu0 %v919
    %1141 = vmatpush2.bf16.msra.mxu0 %v918
    %1142 = vmatprep.subr.bf16.mxu0 %v909
    %1143 = vmatpush2.bf16.msra.mxu0 %v908
    %1144 = vmatprep.subr.bf16.mxu0 %v899
    %1145 = vmatpush2.bf16.msra.mxu0 %v898
    %1146 = vmatprep.subr.bf16.mxu0 %v889
    %1147 = vmatpush2.bf16.msra.mxu0 %v888
    %1148 = vmatprep.subr.bf16.mxu0 %v879
    %1149 = vmatpush2.bf16.msra.mxu0 %v878
    %1150 = vmatprep.mubr.bf16.mxu0 %v311
    %1151 = vmatmul.mubr.bf16.gmra.mxu0 %v310
    %v1152 = vpop.f32.mrf.mxu0
    %v1153 = vadd.f32 %v251, %v1152
    %v1154 = vpop.f32.mrf.mxu0
    %v1155 = vadd.f32 %v255, %v1154
    %v1156 = vpop.f32.mrf.mxu0
    %v1157 = vadd.f32 %v251, %v1156
    %v1158 = vpop.f32.mrf.mxu0
    %v1159 = vadd.f32 %v255, %v1158
    %1160 = vmatprep.mubr.bf16.mxu0 %v313
    %1161 = vmatmul.mubr.bf16.gmra.mxu0 %v312
    %v1162 = vpop.f32.mrf.mxu0
    %v1163 = vadd.f32 %v251, %v1162
    %v1164 = vpop.f32.mrf.mxu0
    %v1165 = vadd.f32 %v255, %v1164
    %v1166 = vpop.f32.mrf.mxu0
    %v1167 = vadd.f32 %v251, %v1166
    %v1168 = vpop.f32.mrf.mxu0
    %v1169 = vadd.f32 %v255, %v1168
    %1170 = vdwg.mxu0
    %1171 = vmatprep.subr.bf16.mxu0 %v871
    %1172 = vmatpush1.bf16.msra.mxu0 %v870
    %1173 = vmatprep.subr.bf16.mxu0 %v861
    %1174 = vmatpush1.bf16.msra.mxu0 %v860
    %1175 = vmatprep.subr.bf16.mxu0 %v851
    %1176 = vmatpush1.bf16.msra.mxu0 %v850
    %1177 = vmatprep.subr.bf16.mxu0 %v841
    %1178 = vmatpush1.bf16.msra.mxu0 %v840
    %1179 = vmatprep.subr.bf16.mxu0 %v831
    %1180 = vmatpush1.bf16.msra.mxu0 %v830
    %1181 = vmatprep.subr.bf16.mxu0 %v821
    %1182 = vmatpush1.bf16.msra.mxu0 %v820
    %1183 = vmatprep.subr.bf16.mxu0 %v811
    %1184 = vmatpush1.bf16.msra.mxu0 %v810
    %1185 = vmatprep.subr.bf16.mxu0 %v801
    %1186 = vmatpush1.bf16.msra.mxu0 %v800
    %1187 = vmatprep.subr.bf16.mxu0 %v951
    %1188 = vmatpush2.bf16.msra.mxu0 %v950
    %1189 = vmatprep.subr.bf16.mxu0 %v941
    %1190 = vmatpush2.bf16.msra.mxu0 %v940
    %1191 = vmatprep.subr.bf16.mxu0 %v931
    %1192 = vmatpush2.bf16.msra.mxu0 %v930
    %1193 = vmatprep.subr.bf16.mxu0 %v921
    %1194 = vmatpush2.bf16.msra.mxu0 %v920
    %1195 = vmatprep.subr.bf16.mxu0 %v911
    %1196 = vmatpush2.bf16.msra.mxu0 %v910
    %1197 = vmatprep.subr.bf16.mxu0 %v901
    %1198 = vmatpush2.bf16.msra.mxu0 %v900
    %1199 = vmatprep.subr.bf16.mxu0 %v891
    %1200 = vmatpush2.bf16.msra.mxu0 %v890
    %1201 = vmatprep.subr.bf16.mxu0 %v881
    %1202 = vmatpush2.bf16.msra.mxu0 %v880
    %1203 = vmatprep.mubr.bf16.mxu0 %v311
    %1204 = vmatmul.mubr.bf16.gmra.mxu0 %v310
    %v1205 = vpop.f32.mrf.mxu0
    %v1206 = vadd.f32 %v259, %v1205
    %v1207 = vpop.f32.mrf.mxu0
    %v1208 = vadd.f32 %v263, %v1207
    %v1209 = vpop.f32.mrf.mxu0
    %v1210 = vadd.f32 %v259, %v1209
    %v1211 = vpop.f32.mrf.mxu0
    %v1212 = vadd.f32 %v263, %v1211
    %1213 = vmatprep.mubr.bf16.mxu0 %v313
    %1214 = vmatmul.mubr.bf16.gmra.mxu0 %v312
    %v1215 = vpop.f32.mrf.mxu0
    %v1216 = vadd.f32 %v259, %v1215
    %v1217 = vpop.f32.mrf.mxu0
    %v1218 = vadd.f32 %v263, %v1217
    %v1219 = vpop.f32.mrf.mxu0
    %v1220 = vadd.f32 %v259, %v1219
    %v1221 = vpop.f32.mrf.mxu0
    %v1222 = vadd.f32 %v263, %v1221
    %1223 = vdwg.mxu0
    %1224 = vmatprep.subr.bf16.mxu0 %v873
    %1225 = vmatpush1.bf16.msra.mxu0 %v872
    %1226 = vmatprep.subr.bf16.mxu0 %v863
    %1227 = vmatpush1.bf16.msra.mxu0 %v862
    %1228 = vmatprep.subr.bf16.mxu0 %v853
    %1229 = vmatpush1.bf16.msra.mxu0 %v852
    %1230 = vmatprep.subr.bf16.mxu0 %v843
    %1231 = vmatpush1.bf16.msra.mxu0 %v842
    %1232 = vmatprep.subr.bf16.mxu0 %v833
    %1233 = vmatpush1.bf16.msra.mxu0 %v832
    %1234 = vmatprep.subr.bf16.mxu0 %v823
    %1235 = vmatpush1.bf16.msra.mxu0 %v822
    %1236 = vmatprep.subr.bf16.mxu0 %v813
    %1237 = vmatpush1.bf16.msra.mxu0 %v812
    %1238 = vmatprep.subr.bf16.mxu0 %v803
    %1239 = vmatpush1.bf16.msra.mxu0 %v802
    %1240 = vmatprep.subr.bf16.mxu0 %v953
    %1241 = vmatpush2.bf16.msra.mxu0 %v952
    %1242 = vmatprep.subr.bf16.mxu0 %v943
    %1243 = vmatpush2.bf16.msra.mxu0 %v942
    %1244 = vmatprep.subr.bf16.mxu0 %v933
    %1245 = vmatpush2.bf16.msra.mxu0 %v932
    %1246 = vmatprep.subr.bf16.mxu0 %v923
    %1247 = vmatpush2.bf16.msra.mxu0 %v922
    %1248 = vmatprep.subr.bf16.mxu0 %v913
    %1249 = vmatpush2.bf16.msra.mxu0 %v912
    %1250 = vmatprep.subr.bf16.mxu0 %v903
    %1251 = vmatpush2.bf16.msra.mxu0 %v902
    %1252 = vmatprep.subr.bf16.mxu0 %v893
    %1253 = vmatpush2.bf16.msra.mxu0 %v892
    %1254 = vmatprep.subr.bf16.mxu0 %v883
    %1255 = vmatpush2.bf16.msra.mxu0 %v882
    %1256 = vmatprep.mubr.bf16.mxu0 %v311
    %1257 = vmatmul.mubr.bf16.gmra.mxu0 %v310
    %v1258 = vpop.f32.mrf.mxu0
    %v1259 = vadd.f32 %v267, %v1258
    %v1260 = vpop.f32.mrf.mxu0
    %v1261 = vadd.f32 %v271, %v1260
    %v1262 = vpop.f32.mrf.mxu0
    %v1263 = vadd.f32 %v267, %v1262
    %v1264 = vpop.f32.mrf.mxu0
    %v1265 = vadd.f32 %v271, %v1264
    %1266 = vmatprep.mubr.bf16.mxu0 %v313
    %1267 = vmatmul.mubr.bf16.gmra.mxu0 %v312
    %v1268 = vpop.f32.mrf.mxu0
    %v1269 = vadd.f32 %v267, %v1268
    %v1270 = vpop.f32.mrf.mxu0
    %v1271 = vadd.f32 %v271, %v1270
    %v1272 = vpop.f32.mrf.mxu0
    %v1273 = vadd.f32 %v267, %v1272
    %v1274 = vpop.f32.mrf.mxu0
    %v1275 = vadd.f32 %v271, %v1274
    %1276 = vdwg.mxu0
    %1277 = vmatprep.subr.bf16.mxu0 %v875
    %1278 = vmatpush1.bf16.msra.mxu0 %v874
    %1279 = vmatprep.subr.bf16.mxu0 %v865
    %1280 = vmatpush1.bf16.msra.mxu0 %v864
    %1281 = vmatprep.subr.bf16.mxu0 %v855
    %1282 = vmatpush1.bf16.msra.mxu0 %v854
    %1283 = vmatprep.subr.bf16.mxu0 %v845
    %1284 = vmatpush1.bf16.msra.mxu0 %v844
    %1285 = vmatprep.subr.bf16.mxu0 %v835
    %1286 = vmatpush1.bf16.msra.mxu0 %v834
    %1287 = vmatprep.subr.bf16.mxu0 %v825
    %1288 = vmatpush1.bf16.msra.mxu0 %v824
    %1289 = vmatprep.subr.bf16.mxu0 %v815
    %1290 = vmatpush1.bf16.msra.mxu0 %v814
    %1291 = vmatprep.subr.bf16.mxu0 %v805
    %1292 = vmatpush1.bf16.msra.mxu0 %v804
    %1293 = vmatprep.subr.bf16.mxu0 %v955
    %1294 = vmatpush2.bf16.msra.mxu0 %v954
    %1295 = vmatprep.subr.bf16.mxu0 %v945
    %1296 = vmatpush2.bf16.msra.mxu0 %v944
    %1297 = vmatprep.subr.bf16.mxu0 %v935
    %1298 = vmatpush2.bf16.msra.mxu0 %v934
    %1299 = vmatprep.subr.bf16.mxu0 %v925
    %1300 = vmatpush2.bf16.msra.mxu0 %v924
    %1301 = vmatprep.subr.bf16.mxu0 %v915
    %1302 = vmatpush2.bf16.msra.mxu0 %v914
    %1303 = vmatprep.subr.bf16.mxu0 %v905
    %1304 = vmatpush2.bf16.msra.mxu0 %v904
    %1305 = vmatprep.subr.bf16.mxu0 %v895
    %1306 = vmatpush2.bf16.msra.mxu0 %v894
    %1307 = vmatprep.subr.bf16.mxu0 %v885
    %1308 = vmatpush2.bf16.msra.mxu0 %v884
    %1309 = vmatprep.mubr.bf16.mxu0 %v311
    %1310 = vmatmul.mubr.bf16.gmra.mxu0 %v310
    %v1311 = vpop.f32.mrf.mxu0
    %v1312 = vadd.f32 %v275, %v1311
    %v1313 = vpop.f32.mrf.mxu0
    %v1314 = vadd.f32 %v279, %v1313
    %v1315 = vpop.f32.mrf.mxu0
    %v1316 = vadd.f32 %v275, %v1315
    %v1317 = vpop.f32.mrf.mxu0
    %v1318 = vadd.f32 %v279, %v1317
    %1319 = vmatprep.mubr.bf16.mxu0 %v313
    %1320 = vmatmul.mubr.bf16.gmra.mxu0 %v312
    %v1321 = vpop.f32.mrf.mxu0
    %v1322 = vadd.f32 %v275, %v1321
    %v1323 = vpop.f32.mrf.mxu0
    %v1324 = vadd.f32 %v279, %v1323
    %v1325 = vpop.f32.mrf.mxu0
    %v1326 = vadd.f32 %v275, %v1325
    %v1327 = vpop.f32.mrf.mxu0
    %v1328 = vadd.f32 %v279, %v1327
    %1329 = vdwg.mxu0
    %1330 = vmatprep.subr.bf16.mxu0 %v877
    %1331 = vmatpush1.bf16.msra.mxu0 %v876
    %1332 = vmatprep.subr.bf16.mxu0 %v867
    %1333 = vmatpush1.bf16.msra.mxu0 %v866
    %1334 = vmatprep.subr.bf16.mxu0 %v857
    %1335 = vmatpush1.bf16.msra.mxu0 %v856
    %1336 = vmatprep.subr.bf16.mxu0 %v847
    %1337 = vmatpush1.bf16.msra.mxu0 %v846
    %1338 = vmatprep.subr.bf16.mxu0 %v837
    %1339 = vmatpush1.bf16.msra.mxu0 %v836
    %1340 = vmatprep.subr.bf16.mxu0 %v827
    %1341 = vmatpush1.bf16.msra.mxu0 %v826
    %1342 = vmatprep.subr.bf16.mxu0 %v817
    %1343 = vmatpush1.bf16.msra.mxu0 %v816
    %1344 = vmatprep.subr.bf16.mxu0 %v807
    %1345 = vmatpush1.bf16.msra.mxu0 %v806
    %1346 = vmatprep.subr.bf16.mxu0 %v957
    %1347 = vmatpush2.bf16.msra.mxu0 %v956
    %1348 = vmatprep.subr.bf16.mxu0 %v947
    %1349 = vmatpush2.bf16.msra.mxu0 %v946
    %1350 = vmatprep.subr.bf16.mxu0 %v937
    %1351 = vmatpush2.bf16.msra.mxu0 %v936
    %1352 = vmatprep.subr.bf16.mxu0 %v927
    %1353 = vmatpush2.bf16.msra.mxu0 %v926
    %1354 = vmatprep.subr.bf16.mxu0 %v917
    %1355 = vmatpush2.bf16.msra.mxu0 %v916
    %1356 = vmatprep.subr.bf16.mxu0 %v907
    %1357 = vmatpush2.bf16.msra.mxu0 %v906
    %1358 = vmatprep.subr.bf16.mxu0 %v897
    %1359 = vmatpush2.bf16.msra.mxu0 %v896
    %1360 = vmatprep.subr.bf16.mxu0 %v887
    %1361 = vmatpush2.bf16.msra.mxu0 %v886
    %1362 = vmatprep.mubr.bf16.mxu0 %v311
    %1363 = vmatmul.mubr.bf16.gmra.mxu0 %v310
    %v1364 = vpop.f32.mrf.mxu0
    %v1365 = vadd.f32 %v283, %v1364
    %v1366 = vpop.f32.mrf.mxu0
    %v1367 = vadd.f32 %v287, %v1366
    %v1368 = vpop.f32.mrf.mxu0
    %v1369 = vadd.f32 %v283, %v1368
    %v1370 = vpop.f32.mrf.mxu0
    %v1371 = vadd.f32 %v287, %v1370
    %1372 = vmatprep.mubr.bf16.mxu0 %v313
    %1373 = vmatmul.mubr.bf16.gmra.mxu0 %v312
    %v1374 = vpop.f32.mrf.mxu0
    %v1375 = vadd.f32 %v283, %v1374
    %v1376 = vpop.f32.mrf.mxu0
    %v1377 = vadd.f32 %v287, %v1376
    %v1378 = vpop.f32.mrf.mxu0
    %v1379 = vadd.f32 %v283, %v1378
    %v1380 = vpop.f32.mrf.mxu0
    %v1381 = vadd.f32 %v287, %v1380
    %1382 = vdwg.mxu0
    %v1383 = vxor.u32 %v1153, 2147483648
    %v1384 = vxor.u32 %v1155, 2147483648
    %v1385 = vxor.u32 %v1206, 2147483648
    %v1386 = vxor.u32 %v1208, 2147483648
    %v1387 = vxor.u32 %v1259, 2147483648
    %v1388 = vxor.u32 %v1261, 2147483648
    %v1389 = vxor.u32 %v1312, 2147483648
    %v1390 = vxor.u32 %v1314, 2147483648
    %v1391 = vxor.u32 %v1365, 2147483648
    %v1392 = vxor.u32 %v1367, 2147483648
    %v1393 = vxor.u32 %v1157, 2147483648
    %v1394 = vxor.u32 %v1159, 2147483648
    %v1395 = vxor.u32 %v1210, 2147483648
    %v1396 = vxor.u32 %v1212, 2147483648
    %v1397 = vxor.u32 %v1263, 2147483648
    %v1398 = vxor.u32 %v1265, 2147483648
    %v1399 = vxor.u32 %v1316, 2147483648
    %v1400 = vxor.u32 %v1318, 2147483648
    %v1401 = vxor.u32 %v1369, 2147483648
    %v1402 = vxor.u32 %v1371, 2147483648
    %v1403 = vxor.u32 %v1163, 2147483648
    %v1404 = vxor.u32 %v1165, 2147483648
    %v1405 = vxor.u32 %v1216, 2147483648
    %v1406 = vxor.u32 %v1218, 2147483648
    %v1407 = vxor.u32 %v1269, 2147483648
    %v1408 = vxor.u32 %v1271, 2147483648
    %v1409 = vxor.u32 %v1322, 2147483648
    %v1410 = vxor.u32 %v1324, 2147483648
    %v1411 = vxor.u32 %v1375, 2147483648
    %v1412 = vxor.u32 %v1377, 2147483648
    %v1413 = vxor.u32 %v1167, 2147483648
    %v1414 = vxor.u32 %v1169, 2147483648
    %v1415 = vxor.u32 %v1220, 2147483648
    %v1416 = vxor.u32 %v1222, 2147483648
    %v1417 = vxor.u32 %v1273, 2147483648
    %v1418 = vxor.u32 %v1275, 2147483648
    %v1419 = vxor.u32 %v1326, 2147483648
    %v1420 = vxor.u32 %v1328, 2147483648
    %v1421 = vxor.u32 %v1379, 2147483648
    %v1422 = vxor.u32 %v1381, 2147483648
    %v1423 = vmul.f32 %v1383, 1.442695
    %v1424 = vpow.pop %v1423
    %v1425 = vmul.f32 %v1384, 1.442695
    %v1426 = vpow.pop %v1425
    %v1427 = vmul.f32 %v1385, 1.442695
    %v1428 = vpow.pop %v1427
    %v1429 = vmul.f32 %v1386, 1.442695
    %v1430 = vpow.pop %v1429
    %v1431 = vmul.f32 %v1387, 1.442695
    %v1432 = vpow.pop %v1431
    %v1433 = vmul.f32 %v1388, 1.442695
    %v1434 = vpow.pop %v1433
    %v1435 = vmul.f32 %v1389, 1.442695
    %v1436 = vpow.pop %v1435
    %v1437 = vmul.f32 %v1390, 1.442695
    %v1438 = vpow.pop %v1437
    %v1439 = vmul.f32 %v1391, 1.442695
    %v1440 = vpow.pop %v1439
    %v1441 = vmul.f32 %v1392, 1.442695
    %v1442 = vpow.pop %v1441
    %v1443 = vmul.f32 %v1393, 1.442695
    %v1444 = vpow.pop %v1443
    %v1445 = vmul.f32 %v1394, 1.442695
    %v1446 = vpow.pop %v1445
    %v1447 = vmul.f32 %v1395, 1.442695
    %v1448 = vpow.pop %v1447
    %v1449 = vmul.f32 %v1396, 1.442695
    %v1450 = vpow.pop %v1449
    %v1451 = vmul.f32 %v1397, 1.442695
    %v1452 = vpow.pop %v1451
    %v1453 = vmul.f32 %v1398, 1.442695
    %v1454 = vpow.pop %v1453
    %v1455 = vmul.f32 %v1399, 1.442695
    %v1456 = vpow.pop %v1455
    %v1457 = vmul.f32 %v1400, 1.442695
    %v1458 = vpow.pop %v1457
    %v1459 = vmul.f32 %v1401, 1.442695
    %v1460 = vpow.pop %v1459
    %v1461 = vmul.f32 %v1402, 1.442695
    %v1462 = vpow.pop %v1461
    %v1463 = vmul.f32 %v1403, 1.442695
    %v1464 = vpow.pop %v1463
    %v1465 = vmul.f32 %v1404, 1.442695
    %v1466 = vpow.pop %v1465
    %v1467 = vmul.f32 %v1405, 1.442695
    %v1468 = vpow.pop %v1467
    %v1469 = vmul.f32 %v1406, 1.442695
    %v1470 = vpow.pop %v1469
    %v1471 = vmul.f32 %v1407, 1.442695
    %v1472 = vpow.pop %v1471
    %v1473 = vmul.f32 %v1408, 1.442695
    %v1474 = vpow.pop %v1473
    %v1475 = vmul.f32 %v1409, 1.442695
    %v1476 = vpow.pop %v1475
    %v1477 = vmul.f32 %v1410, 1.442695
    %v1478 = vpow.pop %v1477
    %v1479 = vmul.f32 %v1411, 1.442695
    %v1480 = vpow.pop %v1479
    %v1481 = vmul.f32 %v1412, 1.442695
    %v1482 = vpow.pop %v1481
    %v1483 = vmul.f32 %v1413, 1.442695
    %v1484 = vpow.pop %v1483
    %v1485 = vmul.f32 %v1414, 1.442695
    %v1486 = vpow.pop %v1485
    %v1487 = vmul.f32 %v1415, 1.442695
    %v1488 = vpow.pop %v1487
    %v1489 = vmul.f32 %v1416, 1.442695
    %v1490 = vpow.pop %v1489
    %v1491 = vmul.f32 %v1417, 1.442695
    %v1492 = vpow.pop %v1491
    %v1493 = vmul.f32 %v1418, 1.442695
    %v1494 = vpow.pop %v1493
    %v1495 = vmul.f32 %v1419, 1.442695
    %v1496 = vpow.pop %v1495
    %v1497 = vmul.f32 %v1420, 1.442695
    %v1498 = vpow.pop %v1497
    %v1499 = vmul.f32 %v1421, 1.442695
    %v1500 = vpow.pop %v1499
    %v1501 = vmul.f32 %v1422, 1.442695
    %v1502 = vpow.pop %v1501
    %v1503 = vadd.f32 %v1424, 1.0
    %v1504 = vadd.f32 %v1426, 1.0
    %v1505 = vadd.f32 %v1428, 1.0
    %v1506 = vadd.f32 %v1430, 1.0
    %v1507 = vadd.f32 %v1432, 1.0
    %v1508 = vadd.f32 %v1434, 1.0
    %v1509 = vadd.f32 %v1436, 1.0
    %v1510 = vadd.f32 %v1438, 1.0
    %v1511 = vadd.f32 %v1440, 1.0
    %v1512 = vadd.f32 %v1442, 1.0
    %v1513 = vadd.f32 %v1444, 1.0
    %v1514 = vadd.f32 %v1446, 1.0
    %v1515 = vadd.f32 %v1448, 1.0
    %v1516 = vadd.f32 %v1450, 1.0
    %v1517 = vadd.f32 %v1452, 1.0
    %v1518 = vadd.f32 %v1454, 1.0
    %v1519 = vadd.f32 %v1456, 1.0
    %v1520 = vadd.f32 %v1458, 1.0
    %v1521 = vadd.f32 %v1460, 1.0
    %v1522 = vadd.f32 %v1462, 1.0
    %v1523 = vadd.f32 %v1464, 1.0
    %v1524 = vadd.f32 %v1466, 1.0
    %v1525 = vadd.f32 %v1468, 1.0
    %v1526 = vadd.f32 %v1470, 1.0
    %v1527 = vadd.f32 %v1472, 1.0
    %v1528 = vadd.f32 %v1474, 1.0
    %v1529 = vadd.f32 %v1476, 1.0
    %v1530 = vadd.f32 %v1478, 1.0
    %v1531 = vadd.f32 %v1480, 1.0
    %v1532 = vadd.f32 %v1482, 1.0
    %v1533 = vadd.f32 %v1484, 1.0
    %v1534 = vadd.f32 %v1486, 1.0
    %v1535 = vadd.f32 %v1488, 1.0
    %v1536 = vadd.f32 %v1490, 1.0
    %v1537 = vadd.f32 %v1492, 1.0
    %v1538 = vadd.f32 %v1494, 1.0
    %v1539 = vadd.f32 %v1496, 1.0
    %v1540 = vadd.f32 %v1498, 1.0
    %v1541 = vadd.f32 %v1500, 1.0
    %v1542 = vadd.f32 %v1502, 1.0
    %v1543 = vrcp.pop %v1503
    %v1544 = vmul.f32 1.0, %v1543
    %v1545 = vrcp.pop %v1504
    %v1546 = vmul.f32 1.0, %v1545
    %v1547 = vrcp.pop %v1505
    %v1548 = vmul.f32 1.0, %v1547
    %v1549 = vrcp.pop %v1506
    %v1550 = vmul.f32 1.0, %v1549
    %v1551 = vrcp.pop %v1507
    %v1552 = vmul.f32 1.0, %v1551
    %v1553 = vrcp.pop %v1508
    %v1554 = vmul.f32 1.0, %v1553
    %v1555 = vrcp.pop %v1509
    %v1556 = vmul.f32 1.0, %v1555
    %v1557 = vrcp.pop %v1510
    %v1558 = vmul.f32 1.0, %v1557
    %v1559 = vrcp.pop %v1511
    %v1560 = vmul.f32 1.0, %v1559
    %v1561 = vrcp.pop %v1512
    %v1562 = vmul.f32 1.0, %v1561
    %v1563 = vrcp.pop %v1513
    %v1564 = vmul.f32 1.0, %v1563
    %v1565 = vrcp.pop %v1514
    %v1566 = vmul.f32 1.0, %v1565
    %v1567 = vrcp.pop %v1515
    %v1568 = vmul.f32 1.0, %v1567
    %v1569 = vrcp.pop %v1516
    %v1570 = vmul.f32 1.0, %v1569
    %v1571 = vrcp.pop %v1517
    %v1572 = vmul.f32 1.0, %v1571
    %v1573 = vrcp.pop %v1518
    %v1574 = vmul.f32 1.0, %v1573
    %v1575 = vrcp.pop %v1519
    %v1576 = vmul.f32 1.0, %v1575
    %v1577 = vrcp.pop %v1520
    %v1578 = vmul.f32 1.0, %v1577
    %v1579 = vrcp.pop %v1521
    %v1580 = vmul.f32 1.0, %v1579
    %v1581 = vrcp.pop %v1522
    %v1582 = vmul.f32 1.0, %v1581
    %v1583 = vrcp.pop %v1523
    %v1584 = vmul.f32 1.0, %v1583
    %v1585 = vrcp.pop %v1524
    %v1586 = vmul.f32 1.0, %v1585
    %v1587 = vrcp.pop %v1525
    %v1588 = vmul.f32 1.0, %v1587
    %v1589 = vrcp.pop %v1526
    %v1590 = vmul.f32 1.0, %v1589
    %v1591 = vrcp.pop %v1527
    %v1592 = vmul.f32 1.0, %v1591
    %v1593 = vrcp.pop %v1528
    %v1594 = vmul.f32 1.0, %v1593
    %v1595 = vrcp.pop %v1529
    %v1596 = vmul.f32 1.0, %v1595
    %v1597 = vrcp.pop %v1530
    %v1598 = vmul.f32 1.0, %v1597
    %v1599 = vrcp.pop %v1531
    %v1600 = vmul.f32 1.0, %v1599
    %v1601 = vrcp.pop %v1532
    %v1602 = vmul.f32 1.0, %v1601
    %v1603 = vrcp.pop %v1533
    %v1604 = vmul.f32 1.0, %v1603
    %v1605 = vrcp.pop %v1534
    %v1606 = vmul.f32 1.0, %v1605
    %v1607 = vrcp.pop %v1535
    %v1608 = vmul.f32 1.0, %v1607
    %v1609 = vrcp.pop %v1536
    %v1610 = vmul.f32 1.0, %v1609
    %v1611 = vrcp.pop %v1537
    %v1612 = vmul.f32 1.0, %v1611
    %v1613 = vrcp.pop %v1538
    %v1614 = vmul.f32 1.0, %v1613
    %v1615 = vrcp.pop %v1539
    %v1616 = vmul.f32 1.0, %v1615
    %v1617 = vrcp.pop %v1540
    %v1618 = vmul.f32 1.0, %v1617
    %v1619 = vrcp.pop %v1541
    %v1620 = vmul.f32 1.0, %v1619
    %v1621 = vrcp.pop %v1542
    %v1622 = vmul.f32 1.0, %v1621
    %v1623 = vmul.f32 %v1153, %v1544
    %v1624 = vmul.f32 %v1155, %v1546
    %v1625 = vmul.f32 %v1206, %v1548
    %v1626 = vmul.f32 %v1208, %v1550
    %v1627 = vmul.f32 %v1259, %v1552
    %v1628 = vmul.f32 %v1261, %v1554
    %v1629 = vmul.f32 %v1312, %v1556
    %v1630 = vmul.f32 %v1314, %v1558
    %v1631 = vmul.f32 %v1365, %v1560
    %v1632 = vmul.f32 %v1367, %v1562
    %v1633 = vmul.f32 %v1157, %v1564
    %v1634 = vmul.f32 %v1159, %v1566
    %v1635 = vmul.f32 %v1210, %v1568
    %v1636 = vmul.f32 %v1212, %v1570
    %v1637 = vmul.f32 %v1263, %v1572
    %v1638 = vmul.f32 %v1265, %v1574
    %v1639 = vmul.f32 %v1316, %v1576
    %v1640 = vmul.f32 %v1318, %v1578
    %v1641 = vmul.f32 %v1369, %v1580
    %v1642 = vmul.f32 %v1371, %v1582
    %v1643 = vmul.f32 %v1163, %v1584
    %v1644 = vmul.f32 %v1165, %v1586
    %v1645 = vmul.f32 %v1216, %v1588
    %v1646 = vmul.f32 %v1218, %v1590
    %v1647 = vmul.f32 %v1269, %v1592
    %v1648 = vmul.f32 %v1271, %v1594
    %v1649 = vmul.f32 %v1322, %v1596
    %v1650 = vmul.f32 %v1324, %v1598
    %v1651 = vmul.f32 %v1375, %v1600
    %v1652 = vmul.f32 %v1377, %v1602
    %v1653 = vmul.f32 %v1167, %v1604
    %v1654 = vmul.f32 %v1169, %v1606
    %v1655 = vmul.f32 %v1220, %v1608
    %v1656 = vmul.f32 %v1222, %v1610
    %v1657 = vmul.f32 %v1273, %v1612
    %v1658 = vmul.f32 %v1275, %v1614
    %v1659 = vmul.f32 %v1326, %v1616
    %v1660 = vmul.f32 %v1328, %v1618
    %v1661 = vmul.f32 %v1379, %v1620
    %v1662 = vmul.f32 %v1381, %v1622
    %v1663 = vld [vmem:[#allocation2] sm:$0xff]
    %v1664 = vld [vmem:[#allocation2 + $0x8] sm:$0xff]
    %v1665 = vld [vmem:[#allocation2 + $0x10] sm:$0xf]
    %v1666 = vadd.f32 %v1623, %v1633
    %v1667 = vrot.slane %v1666, 4
    %v1668 = vadd.f32 %v1666, %v1667
    %v1669 = vrot.slane %v1668, 2
    %v1670 = vadd.f32 %v1668, %v1669
    %v1671 = vrot.slane %v1670, 1
    %v1672 = vadd.f32 %v1670, %v1671
    %v1673 = vadd.f32 %v1624, %v1634
    %v1674 = vrot.slane %v1673, 4
    %v1675 = vadd.f32 %v1673, %v1674
    %v1676 = vrot.slane %v1675, 2
    %v1677 = vadd.f32 %v1675, %v1676
    %v1678 = vrot.slane %v1677, 1
    %v1679 = vadd.f32 %v1677, %v1678
    %v1680 = vadd.f32 %v1625, %v1635
    %v1681 = vrot.slane %v1680, 4
    %v1682 = vadd.f32 %v1680, %v1681
    %v1683 = vrot.slane %v1682, 2
    %v1684 = vadd.f32 %v1682, %v1683
    %v1685 = vrot.slane %v1684, 1
    %v1686 = vadd.f32 %v1684, %v1685
    %v1687 = vadd.f32 %v1626, %v1636
    %v1688 = vrot.slane %v1687, 4
    %v1689 = vadd.f32 %v1687, %v1688
    %v1690 = vrot.slane %v1689, 2
    %v1691 = vadd.f32 %v1689, %v1690
    %v1692 = vrot.slane %v1691, 1
    %v1693 = vadd.f32 %v1691, %v1692
    %v1694 = vadd.f32 %v1627, %v1637
    %v1695 = vrot.slane %v1694, 4
    %v1696 = vadd.f32 %v1694, %v1695
    %v1697 = vrot.slane %v1696, 2
    %v1698 = vadd.f32 %v1696, %v1697
    %v1699 = vrot.slane %v1698, 1
    %v1700 = vadd.f32 %v1698, %v1699
    %v1701 = vadd.f32 %v1628, %v1638
    %v1702 = vrot.slane %v1701, 4
    %v1703 = vadd.f32 %v1701, %v1702
    %v1704 = vrot.slane %v1703, 2
    %v1705 = vadd.f32 %v1703, %v1704
    %v1706 = vrot.slane %v1705, 1
    %v1707 = vadd.f32 %v1705, %v1706
    %v1708 = vadd.f32 %v1629, %v1639
    %v1709 = vrot.slane %v1708, 4
    %v1710 = vadd.f32 %v1708, %v1709
    %v1711 = vrot.slane %v1710, 2
    %v1712 = vadd.f32 %v1710, %v1711
    %v1713 = vrot.slane %v1712, 1
    %v1714 = vadd.f32 %v1712, %v1713
    %v1715 = vadd.f32 %v1630, %v1640
    %v1716 = vrot.slane %v1715, 4
    %v1717 = vadd.f32 %v1715, %v1716
    %v1718 = vrot.slane %v1717, 2
    %v1719 = vadd.f32 %v1717, %v1718
    %v1720 = vrot.slane %v1719, 1
    %v1721 = vadd.f32 %v1719, %v1720
    %v1722 = vadd.f32 %v1631, %v1641
    %v1723 = vrot.slane %v1722, 4
    %v1724 = vadd.f32 %v1722, %v1723
    %v1725 = vrot.slane %v1724, 2
    %v1726 = vadd.f32 %v1724, %v1725
    %v1727 = vrot.slane %v1726, 1
    %v1728 = vadd.f32 %v1726, %v1727
    %v1729 = vadd.f32 %v1632, %v1642
    %v1730 = vrot.slane %v1729, 4
    %v1731 = vadd.f32 %v1729, %v1730
    %v1732 = vrot.slane %v1731, 2
    %v1733 = vadd.f32 %v1731, %v1732
    %v1734 = vrot.slane %v1733, 1
    %v1735 = vadd.f32 %v1733, %v1734
    %v1736 = vadd.f32 %v1643, %v1653
    %v1737 = vrot.slane %v1736, 4
    %v1738 = vadd.f32 %v1736, %v1737
    %v1739 = vrot.slane %v1738, 2
    %v1740 = vadd.f32 %v1738, %v1739
    %v1741 = vrot.slane %v1740, 1
    %v1742 = vadd.f32 %v1740, %v1741
    %v1743 = vadd.f32 %v1644, %v1654
    %v1744 = vrot.slane %v1743, 4
    %v1745 = vadd.f32 %v1743, %v1744
    %v1746 = vrot.slane %v1745, 2
    %v1747 = vadd.f32 %v1745, %v1746
    %v1748 = vrot.slane %v1747, 1
    %v1749 = vadd.f32 %v1747, %v1748
    %v1750 = vadd.f32 %v1645, %v1655
    %v1751 = vrot.slane %v1750, 4
    %v1752 = vadd.f32 %v1750, %v1751
    %v1753 = vrot.slane %v1752, 2
    %v1754 = vadd.f32 %v1752, %v1753
    %v1755 = vrot.slane %v1754, 1
    %v1756 = vadd.f32 %v1754, %v1755
    %v1757 = vadd.f32 %v1646, %v1656
    %v1758 = vrot.slane %v1757, 4
    %v1759 = vadd.f32 %v1757, %v1758
    %v1760 = vrot.slane %v1759, 2
    %v1761 = vadd.f32 %v1759, %v1760
    %v1762 = vrot.slane %v1761, 1
    %v1763 = vadd.f32 %v1761, %v1762
    %v1764 = vadd.f32 %v1647, %v1657
    %v1765 = vrot.slane %v1764, 4
    %v1766 = vadd.f32 %v1764, %v1765
    %v1767 = vrot.slane %v1766, 2
    %v1768 = vadd.f32 %v1766, %v1767
    %v1769 = vrot.slane %v1768, 1
    %v1770 = vadd.f32 %v1768, %v1769
    %v1771 = vadd.f32 %v1648, %v1658
    %v1772 = vrot.slane %v1771, 4
    %v1773 = vadd.f32 %v1771, %v1772
    %v1774 = vrot.slane %v1773, 2
    %v1775 = vadd.f32 %v1773, %v1774
    %v1776 = vrot.slane %v1775, 1
    %v1777 = vadd.f32 %v1775, %v1776
    %v1778 = vadd.f32 %v1649, %v1659
    %v1779 = vrot.slane %v1778, 4
    %v1780 = vadd.f32 %v1778, %v1779
    %v1781 = vrot.slane %v1780, 2
    %v1782 = vadd.f32 %v1780, %v1781
    %v1783 = vrot.slane %v1782, 1
    %v1784 = vadd.f32 %v1782, %v1783
    %v1785 = vadd.f32 %v1650, %v1660
    %v1786 = vrot.slane %v1785, 4
    %v1787 = vadd.f32 %v1785, %v1786
    %v1788 = vrot.slane %v1787, 2
    %v1789 = vadd.f32 %v1787, %v1788
    %v1790 = vrot.slane %v1789, 1
    %v1791 = vadd.f32 %v1789, %v1790
    %v1792 = vadd.f32 %v1651, %v1661
    %v1793 = vrot.slane %v1792, 4
    %v1794 = vadd.f32 %v1792, %v1793
    %v1795 = vrot.slane %v1794, 2
    %v1796 = vadd.f32 %v1794, %v1795
    %v1797 = vrot.slane %v1796, 1
    %v1798 = vadd.f32 %v1796, %v1797
    %v1799 = vadd.f32 %v1652, %v1662
    %v1800 = vrot.slane %v1799, 4
    %v1801 = vadd.f32 %v1799, %v1800
    %v1802 = vrot.slane %v1801, 2
    %v1803 = vadd.f32 %v1801, %v1802
    %v1804 = vrot.slane %v1803, 1
    %v1805 = vadd.f32 %v1803, %v1804
    %v1826 = vcombine.low %v1672, %v1679
    %v1827 = vcombine.low %v1686, %v1693
    %v1829 = vunpack.c.l.s4 1983009808
    %v1830 = vunpack.c.0.s8 %v1829
    %v1831 = vlaneseq
    %v1832 = vshrl.u32 %v1831, 7
    %v1833 = vsub.s32 %v1830, %v1832
    %v1834 = vrot.slane %v1826, %v1833
    %v1836 = vunpack.c.l.s4 1983009808
    %v1837 = vunpack.c.0.s8 %v1836
    %v1838 = vlaneseq
    %v1839 = vshrl.u32 %v1838, 7
    %v1840 = vsub.s32 %v1837, %v1839
    %v1841 = vrot.slane %v1827, %v1840
    %v1842 = vcombine.low %v1834, %v1841
    %v1843 = vcombine.low %v1700, %v1707
    %v1844 = vcombine.low %v1714, %v1721
    %v1846 = vunpack.c.l.s4 1983009808
    %v1847 = vunpack.c.0.s8 %v1846
    %v1848 = vlaneseq
    %v1849 = vshrl.u32 %v1848, 7
    %v1850 = vsub.s32 %v1847, %v1849
    %v1851 = vrot.slane %v1843, %v1850
    %v1853 = vunpack.c.l.s4 1983009808
    %v1854 = vunpack.c.0.s8 %v1853
    %v1855 = vlaneseq
    %v1856 = vshrl.u32 %v1855, 7
    %v1857 = vsub.s32 %v1854, %v1856
    %v1858 = vrot.slane %v1844, %v1857
    %v1859 = vcombine.low %v1851, %v1858
    %v1860 = vcombine.low %v1728, %v1735
    %v1862 = vunpack.c.l.s4 1983009808
    %v1863 = vunpack.c.0.s8 %v1862
    %v1864 = vlaneseq
    %v1865 = vshrl.u32 %v1864, 7
    %v1866 = vsub.s32 %v1863, %v1865
    %v1867 = vrot.slane %v1860, %v1866
    %v1868 = vcombine.low %v1742, %v1749
    %v1869 = vcombine.low %v1756, %v1763
    %v1871 = vunpack.c.l.s4 1983009808
    %v1872 = vunpack.c.0.s8 %v1871
    %v1873 = vlaneseq
    %v1874 = vshrl.u32 %v1873, 7
    %v1875 = vsub.s32 %v1872, %v1874
    %v1876 = vrot.slane %v1868, %v1875
    %v1878 = vunpack.c.l.s4 1983009808
    %v1879 = vunpack.c.0.s8 %v1878
    %v1880 = vlaneseq
    %v1881 = vshrl.u32 %v1880, 7
    %v1882 = vsub.s32 %v1879, %v1881
    %v1883 = vrot.slane %v1869, %v1882
    %v1884 = vcombine.low %v1876, %v1883
    %v1885 = vcombine.low %v1770, %v1777
    %v1886 = vcombine.low %v1784, %v1791
    %v1888 = vunpack.c.l.s4 1983009808
    %v1889 = vunpack.c.0.s8 %v1888
    %v1890 = vlaneseq
    %v1891 = vshrl.u32 %v1890, 7
    %v1892 = vsub.s32 %v1889, %v1891
    %v1893 = vrot.slane %v1885, %v1892
    %v1895 = vunpack.c.l.s4 1983009808
    %v1896 = vunpack.c.0.s8 %v1895
    %v1897 = vlaneseq
    %v1898 = vshrl.u32 %v1897, 7
    %v1899 = vsub.s32 %v1896, %v1898
    %v1900 = vrot.slane %v1886, %v1899
    %v1901 = vcombine.low %v1893, %v1900
    %v1902 = vcombine.low %v1798, %v1805
    %v1904 = vunpack.c.l.s4 1983009808
    %v1905 = vunpack.c.0.s8 %v1904
    %v1906 = vlaneseq
    %v1907 = vshrl.u32 %v1906, 7
    %v1908 = vsub.s32 %v1905, %v1907
    %v1909 = vrot.slane %v1902, %v1908
    %vm1910 = vcmask 1044484
    %v1911 = vsel %vm1910, %v1842, %v1842
    %vm1912 = vcmask 1046534
    %v1913 = vsel %vm1912, %v1842, %v1911
    %v1914 = vrot.slane %v1884, 7
    %vm1915 = vcmask 1041409
    %v1916 = vsel %vm1915, %v1914, %v1913
    %vm1917 = vcmask 1043459
    %v1918 = vsel %vm1917, %v1914, %v1916
    %vm1919 = vcmask 1045509
    %v1920 = vsel %vm1919, %v1914, %v1918
    %vm1921 = vcmask 1047559
    %v1922 = vsel %vm1921, %v1914, %v1920
    %v1923 = vsel %vm1910, %v1859, %v1859
    %v1924 = vsel %vm1912, %v1859, %v1923
    %v1925 = vrot.slane %v1901, 7
    %v1926 = vsel %vm1915, %v1925, %v1924
    %v1927 = vsel %vm1917, %v1925, %v1926
    %v1928 = vsel %vm1919, %v1925, %v1927
    %v1929 = vsel %vm1921, %v1925, %v1928
    %v1930 = vsel %vm1910, %v1867, %v1867
    %v1931 = vsel %vm1912, %v1867, %v1930
    %v1932 = vrot.slane %v1909, 7
    %v1933 = vsel %vm1915, %v1932, %v1931
    %v1934 = vsel %vm1917, %v1932, %v1933
    %v1935 = vsel %vm1919, %v1932, %v1934
    %v1936 = vsel %vm1921, %v1932, %v1935
    %v1940 = vadd.f32 %v1663, %v1922
    %v1941 = vadd.f32 %v1664, %v1929
    %v1942 = vadd.f32 %v1665, %v1936
    %1943 = vst [vmem:[#allocation2] sm:$0xff] %v1940
    %1944 = vst [vmem:[#allocation2 + $0x8] sm:$0xff] %v1941
    %1945 = vst [vmem:[#allocation2 + $0x10] sm:$0xf] %v1942
    // Predicated region
    $region42: #{tpu_custom_call.1} parent=1 // pred_check
      %p1946 = pneg %p73
    $region43: #{tpu_custom_call.1} parent=1 // pred_check_branch
      %1948 = sbr.rel (%p1946) target = $region45
    $region44: #{tpu_custom_call.1} parent=1 // pred_region
      %v1949 = vld [vmem:[#allocation2] sm:$0xff]
      %v1950 = vld [vmem:[#allocation2 + $0x8] sm:$0xff]
      %v1951 = vld [vmem:[#allocation2 + $0x10] sm:$0xf]
      %v1952 = vld [vmem:[#allocation9] sm:$0xff]
      %v1953 = vld [vmem:[#allocation9 + $0x8] sm:$0x3]
      %v1956 = vlaneseq
      %v1957 = vshrl.u32 %v1956, 7
      %v1958 = vsub.s32 0, %v1957
      %v1959 = vrot.slane %v1952, %v1958
      %v1960 = vlaneseq
      %v1961 = vshrl.u32 %v1960, 7
      %v1962 = vsub.s32 1, %v1961
      %v1963 = vrot.slane %v1952, %v1962
      %v1964 = vlaneseq
      %v1965 = vshrl.u32 %v1964, 7
      %v1966 = vsub.s32 2, %v1965
      %v1967 = vrot.slane %v1952, %v1966
      %v1968 = vlaneseq
      %v1969 = vshrl.u32 %v1968, 7
      %v1970 = vsub.s32 3, %v1969
      %v1971 = vrot.slane %v1952, %v1970
      %v1972 = vlaneseq
      %v1973 = vshrl.u32 %v1972, 7
      %v1974 = vsub.s32 4, %v1973
      %v1975 = vrot.slane %v1952, %v1974
      %v1976 = vlaneseq
      %v1977 = vshrl.u32 %v1976, 7
      %v1978 = vsub.s32 5, %v1977
      %v1979 = vrot.slane %v1952, %v1978
      %v1980 = vlaneseq
      %v1981 = vshrl.u32 %v1980, 7
      %v1982 = vsub.s32 6, %v1981
      %v1983 = vrot.slane %v1952, %v1982
      %v1984 = vlaneseq
      %v1985 = vshrl.u32 %v1984, 7
      %v1986 = vsub.s32 7, %v1985
      %v1987 = vrot.slane %v1952, %v1986
      %v1988 = vlaneseq
      %v1989 = vshrl.u32 %v1988, 7
      %v1990 = vsub.s32 0, %v1989
      %v1991 = vrot.slane %v1953, %v1990
      %v1992 = vlaneseq
      %v1993 = vshrl.u32 %v1992, 7
      %v1994 = vsub.s32 1, %v1993
      %v1995 = vrot.slane %v1953, %v1994
      %v1996 = vcombine.low %v1959, %v1963
      %v1997 = vcombine.low %v1967, %v1971
      %v1999 = vunpack.c.l.s4 1983009808
      %v2000 = vunpack.c.0.s8 %v1999
      %v2001 = vlaneseq
      %v2002 = vshrl.u32 %v2001, 7
      %v2003 = vsub.s32 %v2000, %v2002
      %v2004 = vrot.slane %v1996, %v2003
      %v2006 = vunpack.c.l.s4 1983009808
      %v2007 = vunpack.c.0.s8 %v2006
      %v2008 = vlaneseq
      %v2009 = vshrl.u32 %v2008, 7
      %v2010 = vsub.s32 %v2007, %v2009
      %v2011 = vrot.slane %v1997, %v2010
      %v2012 = vcombine.low %v2004, %v2011
      %v2013 = vcombine.low %v1975, %v1979
      %v2014 = vcombine.low %v1983, %v1987
      %v2016 = vunpack.c.l.s4 1983009808
      %v2017 = vunpack.c.0.s8 %v2016
      %v2018 = vlaneseq
      %v2019 = vshrl.u32 %v2018, 7
      %v2020 = vsub.s32 %v2017, %v2019
      %v2021 = vrot.slane %v2013, %v2020
      %v2023 = vunpack.c.l.s4 1983009808
      %v2024 = vunpack.c.0.s8 %v2023
      %v2025 = vlaneseq
      %v2026 = vshrl.u32 %v2025, 7
      %v2027 = vsub.s32 %v2024, %v2026
      %v2028 = vrot.slane %v2014, %v2027
      %v2029 = vcombine.low %v2021, %v2028
      %v2030 = vcombine.low %v1991, %v1995
      %v2032 = vunpack.c.l.s4 1983009808
      %v2033 = vunpack.c.0.s8 %v2032
      %v2034 = vlaneseq
      %v2035 = vshrl.u32 %v2034, 7
      %v2036 = vsub.s32 %v2033, %v2035
      %v2037 = vrot.slane %v2030, %v2036
      %v2041 = vmul.f32 %v1949, %v2012
      %v2042 = vmul.f32 %v1950, %v2029
      %v2043 = vmul.f32 %v1951, %v2037
      %v2047 = vcombine.high %v2041, %v2041
      %v2049 = vunpack.c.l.s4 1983009808
      %v2050 = vunpack.c.0.s8 %v2049
      %v2051 = vlaneseq
      %v2052 = vshrl.u32 %v2051, 7
      %v2053 = vsub.s32 %v2050, %v2052
      %v2054 = vrot.slane %v2041, %v2053
      %v2056 = vunpack.c.l.s4 1983009808
      %v2057 = vunpack.c.0.s8 %v2056
      %v2058 = vlaneseq
      %v2059 = vshrl.u32 %v2058, 7
      %v2060 = vsub.s32 %v2057, %v2059
      %v2061 = vrot.slane %v2047, %v2060
      %v2062 = vcombine.high %v2054, %v2054
      %v2063 = vcombine.high %v2061, %v2061
      %v2064 = vcombine.high %v2042, %v2042
      %v2066 = vunpack.c.l.s4 1983009808
      %v2067 = vunpack.c.0.s8 %v2066
      %v2068 = vlaneseq
      %v2069 = vshrl.u32 %v2068, 7
      %v2070 = vsub.s32 %v2067, %v2069
      %v2071 = vrot.slane %v2042, %v2070
      %v2073 = vunpack.c.l.s4 1983009808
      %v2074 = vunpack.c.0.s8 %v2073
      %v2075 = vlaneseq
      %v2076 = vshrl.u32 %v2075, 7
      %v2077 = vsub.s32 %v2074, %v2076
      %v2078 = vrot.slane %v2064, %v2077
      %v2079 = vcombine.high %v2071, %v2071
      %v2080 = vcombine.high %v2078, %v2078
      %v2082 = vunpack.c.l.s4 1983009808
      %v2083 = vunpack.c.0.s8 %v2082
      %v2084 = vlaneseq
      %v2085 = vshrl.u32 %v2084, 7
      %v2086 = vsub.s32 %v2083, %v2085
      %v2087 = vrot.slane %v2043, %v2086
      %v2088 = vcombine.high %v2087, %v2087
      %vm2099 = vcmask 1041408
      %v2100 = vsel %vm2099, %v2054, 0.0
      %v2101 = vsel %vm2099, %v2062, 0.0
      %v2102 = vadd.f32 %v2100, %v2101
      %v2103 = vsel %vm2099, %v2061, 0.0
      %v2104 = vadd.f32 %v2102, %v2103
      %v2105 = vsel %vm2099, %v2063, 0.0
      %v2106 = vadd.f32 %v2104, %v2105
      %v2107 = vsel %vm2099, %v2071, 0.0
      %v2108 = vadd.f32 %v2106, %v2107
      %v2109 = vsel %vm2099, %v2079, 0.0
      %v2110 = vadd.f32 %v2108, %v2109
      %v2111 = vsel %vm2099, %v2078, 0.0
      %v2112 = vadd.f32 %v2110, %v2111
      %v2113 = vsel %vm2099, %v2080, 0.0
      %v2114 = vadd.f32 %v2112, %v2113
      %v2115 = vsel %vm2099, %v2087, 0.0
      %v2116 = vadd.f32 %v2114, %v2115
      %v2117 = vsel %vm2099, %v2088, 0.0
      %v2118 = vadd.f32 %v2116, %v2117
      %2119 = vadd.xlane.f32.xlu0 %v2118
      %v2120 = vpop.xlane.xlu0 %2119
      %v2121 = vld [vmem:[#allocation3] sm:$0x1]
      %v2123 = vlaneseq
      %v2124 = vshrl.u32 %v2123, 7
      %v2125 = vsub.s32 0, %v2124
      %v2126 = vrot.slane %v2121, %v2125
      %v2128 = vadd.f32 %v2120, %v2126
      %vm2129 = vcmask 1024
      %2130 = vst.msk [vmem:[%s5] sm:$0x3] %vm2129, %v2128
    $region45: #{tpu_custom_call.1} parent=1 // pred_fallthru
      _
    // Predicated region
    $region46: #{tpu_custom_call.1} parent=1 // pred_check
      _
    $region47: #{tpu_custom_call.1} parent=1 // pred_check_branch
      %2132 = sbr.rel (0) target = $region49
    $region48: #{tpu_custom_call.1} parent=1 // pred_region
      _
    $region49: #{tpu_custom_call.1} parent=1 // pred_fallthru
      _
    // Predicated region
    $region50: #{tpu_custom_call.1} parent=1 // pred_check
      _
    $region51: #{tpu_custom_call.1} parent=1 // pred_check_branch
      %2134 = sbr.rel (0) target = $region53
    $region52: #{tpu_custom_call.1} parent=1 // pred_region
      _
    $region53: #{tpu_custom_call.1} parent=1 // pred_fallthru
      _
    %2135 = vsyncpa [#allocation5], 1
    %2136 = vsyncpa [#allocation7], 1
    %2137 = vsyncpa [#allocation10], 1

</llo_original>
